<compile_context>
chip_gen: v7x
topology: tpu7x:2x2x1
jax: 0.10.0
libtpu: 0.0.40
codegen_flags: <defaults>
</compile_context>

<pallas_src>
import math

import jax
import jax.numpy as jnp
from jax.experimental import pallas as pl
from jax.experimental.pallas import tpu as pltpu

# ---------------- config ----------------
B, S, H = 2, 8, 32
NUM_HEADS = 4
HEAD_DIM = H // NUM_HEADS
INTERMEDIATE = 64
LN_EPS = 1e-12


def _gelu_new(x):
    # HF 'gelu_new' / tanh-approx GELU
    return 0.5 * x * (1.0 + jnp.tanh(
        math.sqrt(2.0 / math.pi) * (x + 0.044715 * x * x * x)))


def _layernorm(x, gamma, beta, eps):
    mean = jnp.mean(x, axis=-1, keepdims=True)
    var = jnp.mean((x - mean) * (x - mean), axis=-1, keepdims=True)
    inv = jax.lax.rsqrt(var + eps)
    return (x - mean) * inv * gamma + beta


# ---------------- Pallas kernel ----------------
def sentbert_layer_kernel(x_ref, mask_ref, wqkv_ref, wo_ref, wi_ref, wo2_ref,
                          p_ref, out_ref):
    x = x_ref[...]               # (B*S, H)
    mask = mask_ref[...]         # (B, S) additive attention mask
    p = p_ref[...]               # (8, 128) packed small params

    bqkv = p[0:1, 0:3 * H]       # (1, 3H)  = bq | bk | bv
    bo   = p[1:2, 0:H]
    g1   = p[2:3, 0:H]
    be1  = p[3:4, 0:H]
    bi   = p[4:5, 0:INTERMEDIATE]
    bo2  = p[5:6, 0:H]
    g2   = p[6:7, 0:H]
    be2  = p[7:8, 0:H]

    # ---- fused Q/K/V projection (one MXU pass) ----
    qkv = jnp.dot(x, wqkv_ref[...], preferred_element_type=jnp.float32) + bqkv
    qkv3 = qkv.reshape(B, S, 3 * H)          # major-dim split only (cheap)

    scale = 1.0 / math.sqrt(HEAD_DIM)
    mask_b = mask[:, None, :]                # (B, 1, S) broadcast over queries

    # ---- multi-head attention, batched over B; heads unrolled, all in regs ----
    ctx_parts = []
    for h in range(NUM_HEADS):
        lo = h * HEAD_DIM
        qh = qkv3[:, :, lo:lo + HEAD_DIM]                          # (B, S, dH)
        kh = qkv3[:, :, H + lo:H + lo + HEAD_DIM]                  # (B, S, dH)
        vh = qkv3[:, :, 2 * H + lo:2 * H + lo + HEAD_DIM]          # (B, S, dH)
        s = jnp.einsum('bqd,bkd->bqk', qh, kh,
                       preferred_element_type=jnp.float32) * scale
        s = s + mask_b
        m = jnp.max(s, axis=-1, keepdims=True)
        e = jnp.exp(s - m)
        denom = jnp.sum(e, axis=-1, keepdims=True)
        probs = e * pl.reciprocal(denom, approx=True)              # EUP divide
        ctx_parts.append(jnp.einsum('bqk,bkd->bqd', probs, vh,
                                    preferred_element_type=jnp.float32))
    ctx = jnp.concatenate(ctx_parts, axis=-1).reshape(B * S, H)    # (B*S, H)

    # ---- attention output projection + residual + LayerNorm ----
    attn = jnp.dot(ctx, wo_ref[...], preferred_element_type=jnp.float32) + bo
    ln1 = _layernorm(attn + x, g1, be1, LN_EPS)

    # ---- feed-forward (intermediate + output) + residual + LayerNorm ----
    inter = _gelu_new(
        jnp.dot(ln1, wi_ref[...], preferred_element_type=jnp.float32) + bi)
    ffn = jnp.dot(inter, wo2_ref[...], preferred_element_type=jnp.float32) + bo2
    out = _layernorm(ffn + ln1, g2, be2, LN_EPS)

    out_ref[...] = out.astype(out_ref.dtype)

    # TODO(synk): relative_key position embeddings, cross-attention and
    # past_key_value cache branches are not exercised (config disables them);
    # dropout is identity at inference.


def _pack_small_params(p):
    """Pack all (H,) / (INTERMEDIATE,) vectors into one (8, 128) f32 slab."""
    slab = jnp.zeros((8, 128), jnp.float32)
    slab = slab.at[0, :3 * H].set(
        jnp.concatenate([p['bq'], p['bk'], p['bv']]))
    slab = slab.at[1, :H].set(p['bo'])
    slab = slab.at[2, :H].set(p['g1'])
    slab = slab.at[3, :H].set(p['be1'])
    slab = slab.at[4, :INTERMEDIATE].set(p['bi'])
    slab = slab.at[5, :H].set(p['bo2'])
    slab = slab.at[6, :H].set(p['g2'])
    slab = slab.at[7, :H].set(p['be2'])
    return slab


def sentbert_layer(x, attn_mask, params):
    """x: (B, S, H) f32; attn_mask: (B, 1, S) additive mask; params: dict."""
    b, s, h = x.shape
    x2 = x.reshape(b * s, h)
    mask2 = attn_mask.reshape(b, s)
    wqkv = jnp.concatenate([params['wq'], params['wk'], params['wv']], axis=1)
    slab = _pack_small_params(params)

    vmem_spec = pl.BlockSpec(memory_space=pltpu.MemorySpace.VMEM)
    out2 = pl.pallas_call(
        sentbert_layer_kernel,
        out_shape=jax.ShapeDtypeStruct((b * s, h), jnp.float32),
        in_specs=[vmem_spec] * 7,
        out_specs=vmem_spec,
    )(x2, mask2, wqkv, params['wo'], params['wi'], params['wo2'], slab)
    return out2.reshape(b, s, h)


# ---------------- pure-JAX reference (sanity check) ----------------
def reference_layer(x, attn_mask, p):
    q = x @ p['wq'] + p['bq']
    k = x @ p['wk'] + p['bk']
    v = x @ p['wv'] + p['bv']

    def split(t):  # (B,S,H) -> (B,nH,S,dH)
        return t.reshape(B, S, NUM_HEADS, HEAD_DIM).transpose(0, 2, 1, 3)

    qh, kh, vh = split(q), split(k), split(v)
    scores = jnp.einsum('bhqd,bhkd->bhqk', qh, kh) / math.sqrt(HEAD_DIM)
    scores = scores + attn_mask[:, :, None, :]          # (B,1,1,S) broadcast
    probs = jax.nn.softmax(scores, axis=-1)
    ctx = jnp.einsum('bhqk,bhkd->bhqd', probs, vh)
    ctx = ctx.transpose(0, 2, 1, 3).reshape(B, S, H)

    attn = ctx @ p['wo'] + p['bo']
    ln1 = _layernorm(attn + x, p['g1'], p['be1'], LN_EPS)
    inter = _gelu_new(ln1 @ p['wi'] + p['bi'])
    ffn = inter @ p['wo2'] + p['bo2']
    return _layernorm(ffn + ln1, p['g2'], p['be2'], LN_EPS)


# ---------------- parameter init ----------------
def init_params(key):
    ks = jax.random.split(key, 6)
    scale = 0.02
    # Weights are stored pre-transposed to (in, out): x @ W + b == nn.Linear.
    return {
        'wq': scale * jax.random.normal(ks[0], (H, H), jnp.float32),
        'wk': scale * jax.random.normal(ks[1], (H, H), jnp.float32),
        'wv': scale * jax.random.normal(ks[2], (H, H), jnp.float32),
        'wo': scale * jax.random.normal(ks[3], (H, H), jnp.float32),
        'wi': scale * jax.random.normal(ks[4], (H, INTERMEDIATE), jnp.float32),
        'wo2': scale * jax.random.normal(ks[5], (INTERMEDIATE, H), jnp.float32),
        'bq': jnp.zeros((H,), jnp.float32),
        'bk': jnp.full((H,), 0.01, jnp.float32),
        'bv': jnp.full((H,), -0.01, jnp.float32),
        'bo': jnp.zeros((H,), jnp.float32),
        'bi': jnp.full((INTERMEDIATE,), 0.02, jnp.float32),
        'bo2': jnp.zeros((H,), jnp.float32),
        'g1': jnp.ones((H,), jnp.float32),
        'be1': jnp.zeros((H,), jnp.float32),
        'g2': jnp.ones((H,), jnp.float32),
        'be2': jnp.zeros((H,), jnp.float32),
    }


if __name__ == "__main__":
    key = jax.random.PRNGKey(0)
    kx, kp = jax.random.split(key)
    x = jax.random.normal(kx, (B, S, H), jnp.float32)
    # Additive attention mask (0 = attend, -1e9 = masked), shape (B, 1, S)
    # like BERT's extended mask broadcast over the query axis.  Mask the last
    # two key positions of batch 1 to exercise the mask path.
    attn_mask = jnp.zeros((B, 1, S), jnp.float32)
    attn_mask = attn_mask.at[1, 0, S - 2:].set(-1e9)
    params = init_params(kp)

    out = sentbert_layer(x, attn_mask, params)
    out = jax.block_until_ready(out)

    ref = reference_layer(x, attn_mask, params)
    assert out.shape == (B, S, H)
    assert jnp.allclose(out, ref, atol=2e-2, rtol=2e-2), (
        float(jnp.max(jnp.abs(out - ref))))

    print("KERNEL_OK")
</pallas_src>

<mosaic_0001>
module attributes {stable_mosaic.version = 11 : i64} {
  func.func @sentbert_layer_kernel(%arg0: memref<16x32xf32, #tpu.memory_space<vmem>>, %arg1: memref<2x8xf32, #tpu.memory_space<vmem>>, %arg2: memref<32x96xf32, #tpu.memory_space<vmem>>, %arg3: memref<32x32xf32, #tpu.memory_space<vmem>>, %arg4: memref<32x64xf32, #tpu.memory_space<vmem>>, %arg5: memref<64x32xf32, #tpu.memory_space<vmem>>, %arg6: memref<8x128xf32, #tpu.memory_space<vmem>>, %arg7: memref<16x32xf32, #tpu.memory_space<vmem>>) attributes {dimension_semantics = [], scalar_prefetch = 0 : i64, scratch_operands = 0 : i64, tpu.core_type = #tpu.core_type<tc>} {
    %c0 = arith.constant 0 : index
    %c0_0 = arith.constant 0 : index
    %0 = vector.load %arg0[%c0, %c0_0] : memref<16x32xf32, #tpu.memory_space<vmem>>, vector<16x32xf32>
    %c0_1 = arith.constant 0 : index
    %c0_2 = arith.constant 0 : index
    %1 = vector.load %arg1[%c0_1, %c0_2] : memref<2x8xf32, #tpu.memory_space<vmem>>, vector<2x8xf32>
    %c0_3 = arith.constant 0 : index
    %c0_4 = arith.constant 0 : index
    %2 = vector.load %arg6[%c0_3, %c0_4] : memref<8x128xf32, #tpu.memory_space<vmem>>, vector<8x128xf32>
    %3 = vector.extract_strided_slice %2 {offsets = [0, 0], sizes = [1, 96], strides = [1, 1]} : vector<8x128xf32> to vector<1x96xf32>
    %4 = vector.extract_strided_slice %2 {offsets = [1, 0], sizes = [1, 32], strides = [1, 1]} : vector<8x128xf32> to vector<1x32xf32>
    %5 = vector.extract_strided_slice %2 {offsets = [2, 0], sizes = [1, 32], strides = [1, 1]} : vector<8x128xf32> to vector<1x32xf32>
    %6 = vector.extract_strided_slice %2 {offsets = [3, 0], sizes = [1, 32], strides = [1, 1]} : vector<8x128xf32> to vector<1x32xf32>
    %7 = vector.extract_strided_slice %2 {offsets = [4, 0], sizes = [1, 64], strides = [1, 1]} : vector<8x128xf32> to vector<1x64xf32>
    %8 = vector.extract_strided_slice %2 {offsets = [5, 0], sizes = [1, 32], strides = [1, 1]} : vector<8x128xf32> to vector<1x32xf32>
    %9 = vector.extract_strided_slice %2 {offsets = [6, 0], sizes = [1, 32], strides = [1, 1]} : vector<8x128xf32> to vector<1x32xf32>
    %10 = vector.extract_strided_slice %2 {offsets = [7, 0], sizes = [1, 32], strides = [1, 1]} : vector<8x128xf32> to vector<1x32xf32>
    %c0_5 = arith.constant 0 : index
    %c0_6 = arith.constant 0 : index
    %11 = vector.load %arg2[%c0_5, %c0_6] : memref<32x96xf32, #tpu.memory_space<vmem>>, vector<32x96xf32>
    %cst = arith.constant dense<0.000000e+00> : vector<16x96xf32>
    %12 = tpu.matmul %0, %11, %cst {dimension_numbers = #tpu.dot_dimension_numbers<[1], [0], [0], [1], [0, 0, 1, 1], [], []>} : vector<16x32xf32>, vector<32x96xf32>, vector<16x96xf32> -> vector<16x96xf32>
    %13 = vector.broadcast %3 : vector<1x96xf32> to vector<16x96xf32>
    %14 = arith.addf %12, %13 : vector<16x96xf32>
    %15 = vector.shape_cast %14 : vector<16x96xf32> to vector<2x8x96xf32>
    %16 = vector.shape_cast %1 : vector<2x8xf32> to vector<2x1x8xf32>
    %17 = vector.extract_strided_slice %15 {offsets = [0, 0, 0], sizes = [2, 8, 8], strides = [1, 1, 1]} : vector<2x8x96xf32> to vector<2x8x8xf32>
    %18 = vector.extract_strided_slice %15 {offsets = [0, 0, 32], sizes = [2, 8, 8], strides = [1, 1, 1]} : vector<2x8x96xf32> to vector<2x8x8xf32>
    %19 = vector.extract_strided_slice %15 {offsets = [0, 0, 64], sizes = [2, 8, 8], strides = [1, 1, 1]} : vector<2x8x96xf32> to vector<2x8x8xf32>
    "tpu.trace_start"() <{level = 10 : i32, message = "bqd,bkd->bqk"}> : () -> ()
    %cst_7 = arith.constant dense<0.000000e+00> : vector<2x8x8xf32>
    %20 = tpu.matmul %17, %18, %cst_7 {dimension_numbers = #tpu.dot_dimension_numbers<[2], [2], [1], [1], [0, 0, 0, 1, 1, 1], [0], [0]>} : vector<2x8x8xf32>, vector<2x8x8xf32>, vector<2x8x8xf32> -> vector<2x8x8xf32>
    "tpu.trace_stop"() : () -> ()
    %cst_8 = arith.constant 0.353553385 : f32
    %21 = vector.broadcast %cst_8 : f32 to vector<2x8x8xf32>
    %22 = arith.mulf %20, %21 : vector<2x8x8xf32>
    %23 = vector.broadcast %16 : vector<2x1x8xf32> to vector<2x8x8xf32>
    %24 = arith.addf %22, %23 : vector<2x8x8xf32>
    %cst_9 = arith.constant dense<0xFF800000> : vector<2x8xf32>
    %25 = vector.multi_reduction <maximumf>, %24, %cst_9 [2] : vector<2x8x8xf32> to vector<2x8xf32>
    %26 = vector.shape_cast %25 : vector<2x8xf32> to vector<2x8x1xf32>
    %27 = vector.broadcast %26 : vector<2x8x1xf32> to vector<2x8x8xf32>
    %28 = arith.subf %24, %27 : vector<2x8x8xf32>
    %29 = math.exp %28 : vector<2x8x8xf32>
    %cst_10 = arith.constant dense<0.000000e+00> : vector<2x8xf32>
    %30 = vector.multi_reduction <add>, %29, %cst_10 [2] : vector<2x8x8xf32> to vector<2x8xf32>
    %31 = vector.shape_cast %30 : vector<2x8xf32> to vector<2x8x1xf32>
    %32 = tpu.reciprocal %31 {approx = true} : vector<2x8x1xf32> -> vector<2x8x1xf32>
    %33 = vector.broadcast %32 : vector<2x8x1xf32> to vector<2x8x8xf32>
    %34 = arith.mulf %29, %33 : vector<2x8x8xf32>
    "tpu.trace_start"() <{level = 10 : i32, message = "bqk,bkd->bqd"}> : () -> ()
    %cst_11 = arith.constant dense<0.000000e+00> : vector<2x8x8xf32>
    %35 = tpu.matmul %34, %19, %cst_11 {dimension_numbers = #tpu.dot_dimension_numbers<[2], [1], [1], [2], [0, 0, 0, 1, 1, 2], [0], [0]>} : vector<2x8x8xf32>, vector<2x8x8xf32>, vector<2x8x8xf32> -> vector<2x8x8xf32>
    "tpu.trace_stop"() : () -> ()
    %36 = vector.extract_strided_slice %15 {offsets = [0, 0, 8], sizes = [2, 8, 8], strides = [1, 1, 1]} : vector<2x8x96xf32> to vector<2x8x8xf32>
    %37 = vector.extract_strided_slice %15 {offsets = [0, 0, 40], sizes = [2, 8, 8], strides = [1, 1, 1]} : vector<2x8x96xf32> to vector<2x8x8xf32>
    %38 = vector.extract_strided_slice %15 {offsets = [0, 0, 72], sizes = [2, 8, 8], strides = [1, 1, 1]} : vector<2x8x96xf32> to vector<2x8x8xf32>
    "tpu.trace_start"() <{level = 10 : i32, message = "bqd,bkd->bqk"}> : () -> ()
    %cst_12 = arith.constant dense<0.000000e+00> : vector<2x8x8xf32>
    %39 = tpu.matmul %36, %37, %cst_12 {dimension_numbers = #tpu.dot_dimension_numbers<[2], [2], [1], [1], [0, 0, 0, 1, 1, 1], [0], [0]>} : vector<2x8x8xf32>, vector<2x8x8xf32>, vector<2x8x8xf32> -> vector<2x8x8xf32>
    "tpu.trace_stop"() : () -> ()
    %cst_13 = arith.constant 0.353553385 : f32
    %40 = vector.broadcast %cst_13 : f32 to vector<2x8x8xf32>
    %41 = arith.mulf %39, %40 : vector<2x8x8xf32>
    %42 = vector.broadcast %16 : vector<2x1x8xf32> to vector<2x8x8xf32>
    %43 = arith.addf %41, %42 : vector<2x8x8xf32>
    %cst_14 = arith.constant dense<0xFF800000> : vector<2x8xf32>
    %44 = vector.multi_reduction <maximumf>, %43, %cst_14 [2] : vector<2x8x8xf32> to vector<2x8xf32>
    %45 = vector.shape_cast %44 : vector<2x8xf32> to vector<2x8x1xf32>
    %46 = vector.broadcast %45 : vector<2x8x1xf32> to vector<2x8x8xf32>
    %47 = arith.subf %43, %46 : vector<2x8x8xf32>
    %48 = math.exp %47 : vector<2x8x8xf32>
    %cst_15 = arith.constant dense<0.000000e+00> : vector<2x8xf32>
    %49 = vector.multi_reduction <add>, %48, %cst_15 [2] : vector<2x8x8xf32> to vector<2x8xf32>
    %50 = vector.shape_cast %49 : vector<2x8xf32> to vector<2x8x1xf32>
    %51 = tpu.reciprocal %50 {approx = true} : vector<2x8x1xf32> -> vector<2x8x1xf32>
    %52 = vector.broadcast %51 : vector<2x8x1xf32> to vector<2x8x8xf32>
    %53 = arith.mulf %48, %52 : vector<2x8x8xf32>
    "tpu.trace_start"() <{level = 10 : i32, message = "bqk,bkd->bqd"}> : () -> ()
    %cst_16 = arith.constant dense<0.000000e+00> : vector<2x8x8xf32>
    %54 = tpu.matmul %53, %38, %cst_16 {dimension_numbers = #tpu.dot_dimension_numbers<[2], [1], [1], [2], [0, 0, 0, 1, 1, 2], [0], [0]>} : vector<2x8x8xf32>, vector<2x8x8xf32>, vector<2x8x8xf32> -> vector<2x8x8xf32>
    "tpu.trace_stop"() : () -> ()
    %55 = vector.extract_strided_slice %15 {offsets = [0, 0, 16], sizes = [2, 8, 8], strides = [1, 1, 1]} : vector<2x8x96xf32> to vector<2x8x8xf32>
    %56 = vector.extract_strided_slice %15 {offsets = [0, 0, 48], sizes = [2, 8, 8], strides = [1, 1, 1]} : vector<2x8x96xf32> to vector<2x8x8xf32>
    %57 = vector.extract_strided_slice %15 {offsets = [0, 0, 80], sizes = [2, 8, 8], strides = [1, 1, 1]} : vector<2x8x96xf32> to vector<2x8x8xf32>
    "tpu.trace_start"() <{level = 10 : i32, message = "bqd,bkd->bqk"}> : () -> ()
    %cst_17 = arith.constant dense<0.000000e+00> : vector<2x8x8xf32>
    %58 = tpu.matmul %55, %56, %cst_17 {dimension_numbers = #tpu.dot_dimension_numbers<[2], [2], [1], [1], [0, 0, 0, 1, 1, 1], [0], [0]>} : vector<2x8x8xf32>, vector<2x8x8xf32>, vector<2x8x8xf32> -> vector<2x8x8xf32>
    "tpu.trace_stop"() : () -> ()
    %cst_18 = arith.constant 0.353553385 : f32
    %59 = vector.broadcast %cst_18 : f32 to vector<2x8x8xf32>
    %60 = arith.mulf %58, %59 : vector<2x8x8xf32>
    %61 = vector.broadcast %16 : vector<2x1x8xf32> to vector<2x8x8xf32>
    %62 = arith.addf %60, %61 : vector<2x8x8xf32>
    %cst_19 = arith.constant dense<0xFF800000> : vector<2x8xf32>
    %63 = vector.multi_reduction <maximumf>, %62, %cst_19 [2] : vector<2x8x8xf32> to vector<2x8xf32>
    %64 = vector.shape_cast %63 : vector<2x8xf32> to vector<2x8x1xf32>
    %65 = vector.broadcast %64 : vector<2x8x1xf32> to vector<2x8x8xf32>
    %66 = arith.subf %62, %65 : vector<2x8x8xf32>
    %67 = math.exp %66 : vector<2x8x8xf32>
    %cst_20 = arith.constant dense<0.000000e+00> : vector<2x8xf32>
    %68 = vector.multi_reduction <add>, %67, %cst_20 [2] : vector<2x8x8xf32> to vector<2x8xf32>
    %69 = vector.shape_cast %68 : vector<2x8xf32> to vector<2x8x1xf32>
    %70 = tpu.reciprocal %69 {approx = true} : vector<2x8x1xf32> -> vector<2x8x1xf32>
    %71 = vector.broadcast %70 : vector<2x8x1xf32> to vector<2x8x8xf32>
    %72 = arith.mulf %67, %71 : vector<2x8x8xf32>
    "tpu.trace_start"() <{level = 10 : i32, message = "bqk,bkd->bqd"}> : () -> ()
    %cst_21 = arith.constant dense<0.000000e+00> : vector<2x8x8xf32>
    %73 = tpu.matmul %72, %57, %cst_21 {dimension_numbers = #tpu.dot_dimension_numbers<[2], [1], [1], [2], [0, 0, 0, 1, 1, 2], [0], [0]>} : vector<2x8x8xf32>, vector<2x8x8xf32>, vector<2x8x8xf32> -> vector<2x8x8xf32>
    "tpu.trace_stop"() : () -> ()
    %74 = vector.extract_strided_slice %15 {offsets = [0, 0, 24], sizes = [2, 8, 8], strides = [1, 1, 1]} : vector<2x8x96xf32> to vector<2x8x8xf32>
    %75 = vector.extract_strided_slice %15 {offsets = [0, 0, 56], sizes = [2, 8, 8], strides = [1, 1, 1]} : vector<2x8x96xf32> to vector<2x8x8xf32>
    %76 = vector.extract_strided_slice %15 {offsets = [0, 0, 88], sizes = [2, 8, 8], strides = [1, 1, 1]} : vector<2x8x96xf32> to vector<2x8x8xf32>
    "tpu.trace_start"() <{level = 10 : i32, message = "bqd,bkd->bqk"}> : () -> ()
    %cst_22 = arith.constant dense<0.000000e+00> : vector<2x8x8xf32>
    %77 = tpu.matmul %74, %75, %cst_22 {dimension_numbers = #tpu.dot_dimension_numbers<[2], [2], [1], [1], [0, 0, 0, 1, 1, 1], [0], [0]>} : vector<2x8x8xf32>, vector<2x8x8xf32>, vector<2x8x8xf32> -> vector<2x8x8xf32>
    "tpu.trace_stop"() : () -> ()
    %cst_23 = arith.constant 0.353553385 : f32
    %78 = vector.broadcast %cst_23 : f32 to vector<2x8x8xf32>
    %79 = arith.mulf %77, %78 : vector<2x8x8xf32>
    %80 = vector.broadcast %16 : vector<2x1x8xf32> to vector<2x8x8xf32>
    %81 = arith.addf %79, %80 : vector<2x8x8xf32>
    %cst_24 = arith.constant dense<0xFF800000> : vector<2x8xf32>
    %82 = vector.multi_reduction <maximumf>, %81, %cst_24 [2] : vector<2x8x8xf32> to vector<2x8xf32>
    %83 = vector.shape_cast %82 : vector<2x8xf32> to vector<2x8x1xf32>
    %84 = vector.broadcast %83 : vector<2x8x1xf32> to vector<2x8x8xf32>
    %85 = arith.subf %81, %84 : vector<2x8x8xf32>
    %86 = math.exp %85 : vector<2x8x8xf32>
    %cst_25 = arith.constant dense<0.000000e+00> : vector<2x8xf32>
    %87 = vector.multi_reduction <add>, %86, %cst_25 [2] : vector<2x8x8xf32> to vector<2x8xf32>
    %88 = vector.shape_cast %87 : vector<2x8xf32> to vector<2x8x1xf32>
    %89 = tpu.reciprocal %88 {approx = true} : vector<2x8x1xf32> -> vector<2x8x1xf32>
    %90 = vector.broadcast %89 : vector<2x8x1xf32> to vector<2x8x8xf32>
    %91 = arith.mulf %86, %90 : vector<2x8x8xf32>
    "tpu.trace_start"() <{level = 10 : i32, message = "bqk,bkd->bqd"}> : () -> ()
    %cst_26 = arith.constant dense<0.000000e+00> : vector<2x8x8xf32>
    %92 = tpu.matmul %91, %76, %cst_26 {dimension_numbers = #tpu.dot_dimension_numbers<[2], [1], [1], [2], [0, 0, 0, 1, 1, 2], [0], [0]>} : vector<2x8x8xf32>, vector<2x8x8xf32>, vector<2x8x8xf32> -> vector<2x8x8xf32>
    "tpu.trace_stop"() : () -> ()
    %93 = tpu.concatenate %35, %54, %73, %92 in 2 : vector<2x8x8xf32>, vector<2x8x8xf32>, vector<2x8x8xf32>, vector<2x8x8xf32> -> vector<2x8x32xf32>
    %94 = vector.shape_cast %93 : vector<2x8x32xf32> to vector<16x32xf32>
    %c0_27 = arith.constant 0 : index
    %c0_28 = arith.constant 0 : index
    %95 = vector.load %arg3[%c0_27, %c0_28] : memref<32x32xf32, #tpu.memory_space<vmem>>, vector<32x32xf32>
    %cst_29 = arith.constant dense<0.000000e+00> : vector<16x32xf32>
    %96 = tpu.matmul %94, %95, %cst_29 {dimension_numbers = #tpu.dot_dimension_numbers<[1], [0], [0], [1], [0, 0, 1, 1], [], []>} : vector<16x32xf32>, vector<32x32xf32>, vector<16x32xf32> -> vector<16x32xf32>
    %97 = vector.broadcast %4 : vector<1x32xf32> to vector<16x32xf32>
    %98 = arith.addf %96, %97 : vector<16x32xf32>
    %99 = arith.addf %98, %0 : vector<16x32xf32>
    %cst_30 = arith.constant dense<0.000000e+00> : vector<16xf32>
    %100 = vector.multi_reduction <add>, %99, %cst_30 [1] : vector<16x32xf32> to vector<16xf32>
    %101 = vector.shape_cast %100 : vector<16xf32> to vector<16x1xf32>
    %cst_31 = arith.constant 3.200000e+01 : f32
    %102 = vector.broadcast %cst_31 : f32 to vector<16x1xf32>
    %103 = arith.divf %101, %102 : vector<16x1xf32>
    %104 = vector.broadcast %103 : vector<16x1xf32> to vector<16x32xf32>
    %105 = arith.subf %99, %104 : vector<16x32xf32>
    %106 = vector.broadcast %103 : vector<16x1xf32> to vector<16x32xf32>
    %107 = arith.subf %99, %106 : vector<16x32xf32>
    %108 = arith.mulf %105, %107 : vector<16x32xf32>
    %cst_32 = arith.constant dense<0.000000e+00> : vector<16xf32>
    %109 = vector.multi_reduction <add>, %108, %cst_32 [1] : vector<16x32xf32> to vector<16xf32>
    %110 = vector.shape_cast %109 : vector<16xf32> to vector<16x1xf32>
    %cst_33 = arith.constant 3.200000e+01 : f32
    %111 = vector.broadcast %cst_33 : f32 to vector<16x1xf32>
    %112 = arith.divf %110, %111 : vector<16x1xf32>
    %cst_34 = arith.constant 9.99999996E-13 : f32
    %113 = vector.broadcast %cst_34 : f32 to vector<16x1xf32>
    %114 = arith.addf %112, %113 : vector<16x1xf32>
    %115 = math.rsqrt %114 : vector<16x1xf32>
    %116 = vector.broadcast %103 : vector<16x1xf32> to vector<16x32xf32>
    %117 = arith.subf %99, %116 : vector<16x32xf32>
    %118 = vector.broadcast %115 : vector<16x1xf32> to vector<16x32xf32>
    %119 = arith.mulf %117, %118 : vector<16x32xf32>
    %120 = vector.broadcast %5 : vector<1x32xf32> to vector<16x32xf32>
    %121 = arith.mulf %119, %120 : vector<16x32xf32>
    %122 = vector.broadcast %6 : vector<1x32xf32> to vector<16x32xf32>
    %123 = arith.addf %121, %122 : vector<16x32xf32>
    %c0_35 = arith.constant 0 : index
    %c0_36 = arith.constant 0 : index
    %124 = vector.load %arg4[%c0_35, %c0_36] : memref<32x64xf32, #tpu.memory_space<vmem>>, vector<32x64xf32>
    %cst_37 = arith.constant dense<0.000000e+00> : vector<16x64xf32>
    %125 = tpu.matmul %123, %124, %cst_37 {dimension_numbers = #tpu.dot_dimension_numbers<[1], [0], [0], [1], [0, 0, 1, 1], [], []>} : vector<16x32xf32>, vector<32x64xf32>, vector<16x64xf32> -> vector<16x64xf32>
    %126 = vector.broadcast %7 : vector<1x64xf32> to vector<16x64xf32>
    %127 = arith.addf %125, %126 : vector<16x64xf32>
    %cst_38 = arith.constant 5.000000e-01 : f32
    %128 = vector.broadcast %cst_38 : f32 to vector<16x64xf32>
    %129 = arith.mulf %128, %127 : vector<16x64xf32>
    %cst_39 = arith.constant 4.471500e-02 : f32
    %130 = vector.broadcast %cst_39 : f32 to vector<16x64xf32>
    %131 = arith.mulf %130, %127 : vector<16x64xf32>
    %132 = arith.mulf %131, %127 : vector<16x64xf32>
    %133 = arith.mulf %132, %127 : vector<16x64xf32>
    %134 = arith.addf %127, %133 : vector<16x64xf32>
    %cst_40 = arith.constant 0.797884583 : f32
    %135 = vector.broadcast %cst_40 : f32 to vector<16x64xf32>
    %136 = arith.mulf %135, %134 : vector<16x64xf32>
    %137 = math.tanh %136 : vector<16x64xf32>
    %cst_41 = arith.constant 1.000000e+00 : f32
    %138 = vector.broadcast %cst_41 : f32 to vector<16x64xf32>
    %139 = arith.addf %138, %137 : vector<16x64xf32>
    %140 = arith.mulf %129, %139 : vector<16x64xf32>
    %c0_42 = arith.constant 0 : index
    %c0_43 = arith.constant 0 : index
    %141 = vector.load %arg5[%c0_42, %c0_43] : memref<64x32xf32, #tpu.memory_space<vmem>>, vector<64x32xf32>
    %cst_44 = arith.constant dense<0.000000e+00> : vector<16x32xf32>
    %142 = tpu.matmul %140, %141, %cst_44 {dimension_numbers = #tpu.dot_dimension_numbers<[1], [0], [0], [1], [0, 0, 1, 1], [], []>} : vector<16x64xf32>, vector<64x32xf32>, vector<16x32xf32> -> vector<16x32xf32>
    %143 = vector.broadcast %8 : vector<1x32xf32> to vector<16x32xf32>
    %144 = arith.addf %142, %143 : vector<16x32xf32>
    %145 = arith.addf %144, %123 : vector<16x32xf32>
    %cst_45 = arith.constant dense<0.000000e+00> : vector<16xf32>
    %146 = vector.multi_reduction <add>, %145, %cst_45 [1] : vector<16x32xf32> to vector<16xf32>
    %147 = vector.shape_cast %146 : vector<16xf32> to vector<16x1xf32>
    %cst_46 = arith.constant 3.200000e+01 : f32
    %148 = vector.broadcast %cst_46 : f32 to vector<16x1xf32>
    %149 = arith.divf %147, %148 : vector<16x1xf32>
    %150 = vector.broadcast %149 : vector<16x1xf32> to vector<16x32xf32>
    %151 = arith.subf %145, %150 : vector<16x32xf32>
    %152 = vector.broadcast %149 : vector<16x1xf32> to vector<16x32xf32>
    %153 = arith.subf %145, %152 : vector<16x32xf32>
    %154 = arith.mulf %151, %153 : vector<16x32xf32>
    %cst_47 = arith.constant dense<0.000000e+00> : vector<16xf32>
    %155 = vector.multi_reduction <add>, %154, %cst_47 [1] : vector<16x32xf32> to vector<16xf32>
    %156 = vector.shape_cast %155 : vector<16xf32> to vector<16x1xf32>
    %cst_48 = arith.constant 3.200000e+01 : f32
    %157 = vector.broadcast %cst_48 : f32 to vector<16x1xf32>
    %158 = arith.divf %156, %157 : vector<16x1xf32>
    %cst_49 = arith.constant 9.99999996E-13 : f32
    %159 = vector.broadcast %cst_49 : f32 to vector<16x1xf32>
    %160 = arith.addf %158, %159 : vector<16x1xf32>
    %161 = math.rsqrt %160 : vector<16x1xf32>
    %162 = vector.broadcast %149 : vector<16x1xf32> to vector<16x32xf32>
    %163 = arith.subf %145, %162 : vector<16x32xf32>
    %164 = vector.broadcast %161 : vector<16x1xf32> to vector<16x32xf32>
    %165 = arith.mulf %163, %164 : vector<16x32xf32>
    %166 = vector.broadcast %9 : vector<1x32xf32> to vector<16x32xf32>
    %167 = arith.mulf %165, %166 : vector<16x32xf32>
    %168 = vector.broadcast %10 : vector<1x32xf32> to vector<16x32xf32>
    %169 = arith.addf %167, %168 : vector<16x32xf32>
    %c0_50 = arith.constant 0 : index
    %c0_51 = arith.constant 0 : index
    %170 = vector.load %arg7[%c0_50, %c0_51] : memref<16x32xf32, #tpu.memory_space<vmem>>, vector<16x32xf32>
    tpu.vector_store %arg7[%c0_50, %c0_51], %169 {strides = array<i32>} : memref<16x32xf32, #tpu.memory_space<vmem>>, vector<16x32xf32>,
    return
  }
}

</mosaic_0001>

<llo_original>
// kernel: tpu_custom_call.1
$region0: #{tpu_custom_call.1}
  #allocation0 [shape = 'u32[]', space=smem, size = 0x4, offset = 0x4, fixed_abs, tag = 'smem constant byte address 0x4 - core index']
  #allocation1 [shape = 'u32[144,128]{1,0:T(1,128)}', space=vmem, size = 0x12000, scoped, tag = 'internal scratch']
  %s0 = inlined_call_operand.hbm [shape: f32[16,32], index: 0, kind: input, shape index: {}]
  %s1 = inlined_call_operand.vmem [shape: f32[2,8], index: 1, kind: input, shape index: {}]
  %s2 = inlined_call_operand.vmem [shape: f32[32,96], index: 2, kind: input, shape index: {}]
  %s3 = inlined_call_operand.vmem [shape: f32[32,32], index: 3, kind: input, shape index: {}]
  %s4 = inlined_call_operand.vmem [shape: f32[32,64], index: 4, kind: input, shape index: {}]
  %s5 = inlined_call_operand.vmem [shape: f32[64,32], index: 5, kind: input, shape index: {}]
  %s6 = inlined_call_operand.vmem [shape: f32[8,128], index: 6, kind: input, shape index: {}]
  %s7 = inlined_call_operand.hbm [shape: f32[16,32], index: 7, kind: output, shape index: {}]
  %s8 = sld [smem:[#allocation0]]
  $region42: #{tpu_custom_call.1} parent=0
    _
  %s10 = ssub.s32 1, %s8
  %s11 = scalar_select 0, %s10, %s8
  $region1: #{tpu_custom_call.1} parent=0
    #allocation2 [shape = 'u8[8192]{0}', space=vmem, size = 0x2000, scoped, tag = 'input window, operand 0, single buffered']
    #allocation3 [shape = 's32[1]{0}', space=sflag, size = 0x4, scoped, tag = 'scoped memory for tpu_custom_call.1']
    #allocation4 [shape = 's32[1]{0}', space=sflag, size = 0x4, scoped, tag = 'scoped memory for tpu_custom_call.1']
    #allocation5 [shape = 'u8[8192]{0}', space=vmem, size = 0x2000, scoped, tag = 'output window, operand 0, single buffered']
    %12 = vsyncpa [#allocation3], 0
    %13 = vsyncpa [#allocation4], 0
    // Predicated region
    $region2: #{tpu_custom_call.1} parent=1 // pred_check
      _
    $region3: #{tpu_custom_call.1} parent=1 // pred_check_branch
      %15 = sbr.rel (0) target = $region5
    $region4: #{tpu_custom_call.1} parent=1 // pred_region
      %s17 = ssub.s32 256, 256
      %18 = vsyncadd [#allocation3], %s17
      %s19 = sshll.u32 [#allocation2], 4
      %s20 = int_to_ptr.vmem [resolvable:$true] %s19
      %25 = dma.hbm_to_vmem [thread:$0]  %s0, 256, %s20, [#allocation3], 128, 128, 8
    $region5: #{tpu_custom_call.1} parent=1 // pred_fallthru
      _
    // Predicated region
    $region6: #{tpu_custom_call.1} parent=1 // pred_check
      _
    $region7: #{tpu_custom_call.1} parent=1 // pred_check_branch
      %27 = sbr.rel (0) target = $region9
    $region8: #{tpu_custom_call.1} parent=1 // pred_region
      _
    $region9: #{tpu_custom_call.1} parent=1 // pred_fallthru
      _
    // Predicated region
    $region10: #{tpu_custom_call.1} parent=1 // pred_check
      _
    $region11: #{tpu_custom_call.1} parent=1 // pred_check_branch
      %29 = sbr.rel (0) target = $region13
    $region12: #{tpu_custom_call.1} parent=1 // pred_region
      _
    $region13: #{tpu_custom_call.1} parent=1 // pred_fallthru
      _
    // Predicated region
    $region14: #{tpu_custom_call.1} parent=1 // pred_check
      _
    $region15: #{tpu_custom_call.1} parent=1 // pred_check_branch
      %31 = sbr.rel (0) target = $region17
    $region16: #{tpu_custom_call.1} parent=1 // pred_region
      _
    $region17: #{tpu_custom_call.1} parent=1 // pred_fallthru
      _
    // Predicated region
    $region18: #{tpu_custom_call.1} parent=1 // pred_check
      _
    $region19: #{tpu_custom_call.1} parent=1 // pred_check_branch
      %33 = sbr.rel (0) target = $region21
    $region20: #{tpu_custom_call.1} parent=1 // pred_region
      _
    $region21: #{tpu_custom_call.1} parent=1 // pred_fallthru
      _
    // Predicated region
    $region22: #{tpu_custom_call.1} parent=1 // pred_check
      _
    $region23: #{tpu_custom_call.1} parent=1 // pred_check_branch
      %35 = sbr.rel (0) target = $region25
    $region24: #{tpu_custom_call.1} parent=1 // pred_region
      _
    $region25: #{tpu_custom_call.1} parent=1 // pred_fallthru
      _
    // Predicated region
    $region26: #{tpu_custom_call.1} parent=1 // pred_check
      _
    $region27: #{tpu_custom_call.1} parent=1 // pred_check_branch
      %37 = sbr.rel (0) target = $region29
    $region28: #{tpu_custom_call.1} parent=1 // pred_region
      _
    $region29: #{tpu_custom_call.1} parent=1 // pred_fallthru
      _
    // Predicated region
    $region30: #{tpu_custom_call.1} parent=1 // pred_check
      _
    $region31: #{tpu_custom_call.1} parent=1 // pred_check_branch
      %39 = sbr.rel (0) target = $region33
    $region32: #{tpu_custom_call.1} parent=1 // pred_region
      %40 = dma.done [#allocation3], 256
    $region33: #{tpu_custom_call.1} parent=1 // pred_fallthru
      _
    %v41 = vld [vmem:[#allocation2] sm:$0xff]
    %v42 = vld [vmem:[#allocation2 + $0x8] sm:$0xff]
    %v43 = vld [vmem:[%s1] sm:$0x3]
    %v44 = vld [vmem:[%s6] sm:$0xff]
    %v45 = vld [vmem:[%s2] sm:$0xff]
    %v46 = vld [vmem:[%s2 + $0x8] sm:$0xff]
    %v47 = vld [vmem:[%s2 + $0x10] sm:$0xff]
    %v48 = vld [vmem:[%s2 + $0x18] sm:$0xff]
    %v49 = vlaneseq
    %v50 = vshrl.u32 %v49, 7
    %v51 = vsub.s32 0, %v50
    %v52 = vrot.slane %v44, %v51
    %vm53 = vcmask 261120
    %v55 = vsel %vm53, %v41, 0
    %v58 = vsel %vm53, %v42, 0
    %60 = vmatprep.subr.mxu0 0.0
    %61 = vmatpush1.msra.mxu0 %v45
    %62 = vmatprep.subr.mxu0 0.0
    %63 = vmatpush1.msra.mxu0 %v46
    %64 = vmatprep.subr.mxu0 0.0
    %65 = vmatpush1.msra.mxu0 %v47
    %66 = vmatprep.subr.mxu0 0.0
    %67 = vmatpush1.msra.mxu0 %v48
    %68 = vmatprep.subr.mxu0 0.0
    %69 = vmatpush1.msra.mxu0 0.0
    %70 = vmatprep.subr.mxu0 0.0
    %71 = vmatpush1.msra.mxu0 0.0
    %72 = vmatprep.subr.mxu0 0.0
    %73 = vmatpush1.msra.mxu0 0.0
    %74 = vmatprep.subr.mxu0 0.0
    %75 = vmatpush1.msra.mxu0 0.0
    %76 = vmatprep.subr.mxu0 0.0
    %77 = vmatpush1.msra.mxu0 0.0
    %78 = vmatprep.subr.mxu0 0.0
    %79 = vmatpush1.msra.mxu0 0.0
    %80 = vmatprep.subr.mxu0 0.0
    %81 = vmatpush1.msra.mxu0 0.0
    %82 = vmatprep.subr.mxu0 0.0
    %83 = vmatpush1.msra.mxu0 0.0
    %84 = vmatprep.subr.mxu0 0.0
    %85 = vmatpush1.msra.mxu0 0.0
    %86 = vmatprep.subr.mxu0 0.0
    %87 = vmatpush1.msra.mxu0 0.0
    %88 = vmatprep.subr.mxu0 0.0
    %89 = vmatpush1.msra.mxu0 0.0
    %90 = vmatprep.subr.mxu0 0.0
    %91 = vmatpush1.msra.mxu0 0.0
    %92 = vmatprep.subr.mxu0 0.0
    %93 = vmatpush1.msra.mxu0 0.0
    %94 = vmatprep.subr.mxu0 0.0
    %95 = vmatpush1.msra.mxu0 0.0
    %96 = vmatprep.subr.mxu0 0.0
    %97 = vmatpush1.msra.mxu0 0.0
    %98 = vmatprep.subr.mxu0 0.0
    %99 = vmatpush1.msra.mxu0 0.0
    %100 = vmatprep.subr.mxu0 0.0
    %101 = vmatpush1.msra.mxu0 0.0
    %102 = vmatprep.subr.mxu0 0.0
    %103 = vmatpush1.msra.mxu0 0.0
    %104 = vmatprep.subr.mxu0 0.0
    %105 = vmatpush1.msra.mxu0 0.0
    %106 = vmatprep.subr.mxu0 0.0
    %107 = vmatpush1.msra.mxu0 0.0
    %108 = vmatprep.subr.mxu0 0.0
    %109 = vmatpush1.msra.mxu0 0.0
    %110 = vmatprep.subr.mxu0 0.0
    %111 = vmatpush1.msra.mxu0 0.0
    %112 = vmatprep.subr.mxu0 0.0
    %113 = vmatpush1.msra.mxu0 0.0
    %114 = vmatprep.subr.mxu0 0.0
    %115 = vmatpush1.msra.mxu0 0.0
    %116 = vmatprep.subr.mxu0 0.0
    %117 = vmatpush1.msra.mxu0 0.0
    %118 = vmatprep.subr.mxu0 0.0
    %119 = vmatpush1.msra.mxu0 0.0
    %120 = vmatprep.subr.mxu0 0.0
    %121 = vmatpush1.msra.mxu0 0.0
    %122 = vmatprep.subr.mxu0 0.0
    %123 = vmatpush1.msra.mxu0 0.0
    %124 = vmatprep.mubr.f32.mxu0 0.0
    %125 = vmatmul.mubr.f32.gmra.mrb[0].mxu0 %v55
    %v126 = vpop.f32.mrb[0].mxu0
    %v127 = vadd.f32 %v52, %v126
    %v128 = vpop.f32.mrb[0].mxu0
    %129 = vmatprep.mubr.f32.mxu0 0.0
    %130 = vmatmul.mubr.f32.gmra.mrb[0].mxu0 %v58
    %v131 = vpop.f32.mrb[0].mxu0
    %v132 = vadd.f32 %v52, %v131
    %v133 = vpop.f32.mrb[0].mxu0
    %134 = vdwg.mxu0
    %v137 = vunpack.c.l.s4 1966171168
    %v138 = vunpack.c.0.s8 %v137
    %v139 = vlaneseq
    %v140 = vshrl.u32 %v139, 7
    %v141 = vsub.s32 %v138, %v140
    %v142 = vrot.slane %v43, %v141
    %v143 = vcombine.high %v142, %v142
    %v145 = vunpack.c.l.s4 1966171168
    %v146 = vunpack.c.0.s8 %v145
    %v147 = vlaneseq
    %v148 = vshrl.u32 %v147, 7
    %v149 = vsub.s32 %v146, %v148
    %v150 = vrot.slane %v142, %v149
    %v152 = vunpack.c.l.s4 1966171168
    %v153 = vunpack.c.0.s8 %v152
    %v154 = vlaneseq
    %v155 = vshrl.u32 %v154, 7
    %v156 = vsub.s32 %v153, %v155
    %v157 = vrot.slane %v143, %v156
    %159 = vrot.lane.b32.xlu0 %v127, 96
    %v160 = vpop.permute.xlu0 %159
    %vm161 = vcmask 64512
    %v162 = vsel %vm161, %v127, 0
    %v164 = vsel %vm161, %v160, 0
    %166 = vmatprep.subr.mxu0 0.0
    %167 = vmatpush1.xpose.msra.mxu0 %v164
    %168 = vmatprep.subr.mxu0 0.0
    %169 = vmatpush1.xpose.msra.mxu0 0.0
    %170 = vmatprep.subr.mxu0 0.0
    %171 = vmatpush1.xpose.msra.mxu0 0.0
    %172 = vmatprep.subr.mxu0 0.0
    %173 = vmatpush1.xpose.msra.mxu0 0.0
    %174 = vmatprep.subr.mxu0 0.0
    %175 = vmatpush1.xpose.msra.mxu0 0.0
    %176 = vmatprep.subr.mxu0 0.0
    %177 = vmatpush1.xpose.msra.mxu0 0.0
    %178 = vmatprep.subr.mxu0 0.0
    %179 = vmatpush1.xpose.msra.mxu0 0.0
    %180 = vmatprep.subr.mxu0 0.0
    %181 = vmatpush1.xpose.msra.mxu0 0.0
    %182 = vmatprep.subr.mxu0 0.0
    %183 = vmatpush1.xpose.msra.mxu0 0.0
    %184 = vmatprep.subr.mxu0 0.0
    %185 = vmatpush1.xpose.msra.mxu0 0.0
    %186 = vmatprep.subr.mxu0 0.0
    %187 = vmatpush1.xpose.msra.mxu0 0.0
    %188 = vmatprep.subr.mxu0 0.0
    %189 = vmatpush1.xpose.msra.mxu0 0.0
    %190 = vmatprep.subr.mxu0 0.0
    %191 = vmatpush1.xpose.msra.mxu0 0.0
    %192 = vmatprep.subr.mxu0 0.0
    %193 = vmatpush1.xpose.msra.mxu0 0.0
    %194 = vmatprep.subr.mxu0 0.0
    %195 = vmatpush1.xpose.msra.mxu0 0.0
    %196 = vmatprep.subr.mxu0 0.0
    %197 = vmatpush1.xpose.msra.mxu0 0.0
    %198 = vmatprep.subr.mxu0 0.0
    %199 = vmatpush1.xpose.msra.mxu0 0.0
    %200 = vmatprep.subr.mxu0 0.0
    %201 = vmatpush1.xpose.msra.mxu0 0.0
    %202 = vmatprep.subr.mxu0 0.0
    %203 = vmatpush1.xpose.msra.mxu0 0.0
    %204 = vmatprep.subr.mxu0 0.0
    %205 = vmatpush1.xpose.msra.mxu0 0.0
    %206 = vmatprep.subr.mxu0 0.0
    %207 = vmatpush1.xpose.msra.mxu0 0.0
    %208 = vmatprep.subr.mxu0 0.0
    %209 = vmatpush1.xpose.msra.mxu0 0.0
    %210 = vmatprep.subr.mxu0 0.0
    %211 = vmatpush1.xpose.msra.mxu0 0.0
    %212 = vmatprep.subr.mxu0 0.0
    %213 = vmatpush1.xpose.msra.mxu0 0.0
    %214 = vmatprep.subr.mxu0 0.0
    %215 = vmatpush1.xpose.msra.mxu0 0.0
    %216 = vmatprep.subr.mxu0 0.0
    %217 = vmatpush1.xpose.msra.mxu0 0.0
    %218 = vmatprep.subr.mxu0 0.0
    %219 = vmatpush1.xpose.msra.mxu0 0.0
    %220 = vmatprep.subr.mxu0 0.0
    %221 = vmatpush1.xpose.msra.mxu0 0.0
    %222 = vmatprep.subr.mxu0 0.0
    %223 = vmatpush1.xpose.msra.mxu0 0.0
    %224 = vmatprep.subr.mxu0 0.0
    %225 = vmatpush1.xpose.msra.mxu0 0.0
    %226 = vmatprep.subr.mxu0 0.0
    %227 = vmatpush1.xpose.msra.mxu0 0.0
    %228 = vmatprep.subr.mxu0 0.0
    %229 = vmatpush1.xpose.msra.mxu0 0.0
    %230 = vmatprep.mubr.f32.mxu0 0.0
    %231 = vmatmul.mubr.f32.gmra.mrb[0].mxu0 %v162
    %v232 = vpop.f32.mrb[0].mxu0
    %v233 = vadd.f32 0.0, %v232
    %v234 = vpop.f32.mrb[0].mxu0
    %235 = vdwg.mxu0
    %237 = vrot.lane.b32.xlu0 %v132, 96
    %v238 = vpop.permute.xlu0 %237
    %v239 = vsel %vm161, %v132, 0
    %v241 = vsel %vm161, %v238, 0
    %243 = vmatprep.subr.mxu0 0.0
    %244 = vmatpush1.xpose.msra.mxu0 %v241
    %245 = vmatprep.subr.mxu0 0.0
    %246 = vmatpush1.xpose.msra.mxu0 0.0
    %247 = vmatprep.subr.mxu0 0.0
    %248 = vmatpush1.xpose.msra.mxu0 0.0
    %249 = vmatprep.subr.mxu0 0.0
    %250 = vmatpush1.xpose.msra.mxu0 0.0
    %251 = vmatprep.subr.mxu0 0.0
    %252 = vmatpush1.xpose.msra.mxu0 0.0
    %253 = vmatprep.subr.mxu0 0.0
    %254 = vmatpush1.xpose.msra.mxu0 0.0
    %255 = vmatprep.subr.mxu0 0.0
    %256 = vmatpush1.xpose.msra.mxu0 0.0
    %257 = vmatprep.subr.mxu0 0.0
    %258 = vmatpush1.xpose.msra.mxu0 0.0
    %259 = vmatprep.subr.mxu0 0.0
    %260 = vmatpush1.xpose.msra.mxu0 0.0
    %261 = vmatprep.subr.mxu0 0.0
    %262 = vmatpush1.xpose.msra.mxu0 0.0
    %263 = vmatprep.subr.mxu0 0.0
    %264 = vmatpush1.xpose.msra.mxu0 0.0
    %265 = vmatprep.subr.mxu0 0.0
    %266 = vmatpush1.xpose.msra.mxu0 0.0
    %267 = vmatprep.subr.mxu0 0.0
    %268 = vmatpush1.xpose.msra.mxu0 0.0
    %269 = vmatprep.subr.mxu0 0.0
    %270 = vmatpush1.xpose.msra.mxu0 0.0
    %271 = vmatprep.subr.mxu0 0.0
    %272 = vmatpush1.xpose.msra.mxu0 0.0
    %273 = vmatprep.subr.mxu0 0.0
    %274 = vmatpush1.xpose.msra.mxu0 0.0
    %275 = vmatprep.subr.mxu0 0.0
    %276 = vmatpush1.xpose.msra.mxu0 0.0
    %277 = vmatprep.subr.mxu0 0.0
    %278 = vmatpush1.xpose.msra.mxu0 0.0
    %279 = vmatprep.subr.mxu0 0.0
    %280 = vmatpush1.xpose.msra.mxu0 0.0
    %281 = vmatprep.subr.mxu0 0.0
    %282 = vmatpush1.xpose.msra.mxu0 0.0
    %283 = vmatprep.subr.mxu0 0.0
    %284 = vmatpush1.xpose.msra.mxu0 0.0
    %285 = vmatprep.subr.mxu0 0.0
    %286 = vmatpush1.xpose.msra.mxu0 0.0
    %287 = vmatprep.subr.mxu0 0.0
    %288 = vmatpush1.xpose.msra.mxu0 0.0
    %289 = vmatprep.subr.mxu0 0.0
    %290 = vmatpush1.xpose.msra.mxu0 0.0
    %291 = vmatprep.subr.mxu0 0.0
    %292 = vmatpush1.xpose.msra.mxu0 0.0
    %293 = vmatprep.subr.mxu0 0.0
    %294 = vmatpush1.xpose.msra.mxu0 0.0
    %295 = vmatprep.subr.mxu0 0.0
    %296 = vmatpush1.xpose.msra.mxu0 0.0
    %297 = vmatprep.subr.mxu0 0.0
    %298 = vmatpush1.xpose.msra.mxu0 0.0
    %299 = vmatprep.subr.mxu0 0.0
    %300 = vmatpush1.xpose.msra.mxu0 0.0
    %301 = vmatprep.subr.mxu0 0.0
    %302 = vmatpush1.xpose.msra.mxu0 0.0
    %303 = vmatprep.subr.mxu0 0.0
    %304 = vmatpush1.xpose.msra.mxu0 0.0
    %305 = vmatprep.subr.mxu0 0.0
    %306 = vmatpush1.xpose.msra.mxu0 0.0
    %307 = vmatprep.mubr.f32.mxu0 0.0
    %308 = vmatmul.mubr.f32.gmra.mrb[0].mxu0 %v239
    %v309 = vpop.f32.mrb[0].mxu0
    %v310 = vadd.f32 0.0, %v309
    %v311 = vpop.f32.mrb[0].mxu0
    %312 = vdwg.mxu0
    %v313 = vmul.f32 %v233, 0.35355338
    %v314 = vmul.f32 %v310, 0.35355338
    %v315 = vlaneseq
    %v316 = vshrl.u32 %v315, 7
    %v317 = vsub.s32 0, %v316
    %v318 = vrot.slane %v150, %v317
    %v319 = vlaneseq
    %v320 = vshrl.u32 %v319, 7
    %v321 = vsub.s32 0, %v320
    %v322 = vrot.slane %v157, %v321
    %v325 = vadd.f32 %v313, %v318
    %v326 = vadd.f32 %v314, %v322
    %v327 = vsel %vm161, %v325, -inf
    %328 = vmax.xlane.f32.xlu0 %v327
    %v329 = vpop.xlane.xlu0 %328
    %v330 = vsel %vm161, %v326, -inf
    %331 = vmax.xlane.f32.xlu0 %v330
    %v332 = vpop.xlane.xlu0 %331
    %v333 = vsub.f32 %v325, %v329
    %v334 = vsub.f32 %v326, %v332
    %v335 = vmul.f32 %v333, 1.442695
    %v336 = vpow.pop %v335
    %v337 = vmul.f32 %v334, 1.442695
    %v338 = vpow.pop %v337
    %v339 = vsel %vm161, %v336, 0.0
    %340 = vadd.xlane.f32.xlu0 %v339
    %v341 = vpop.xlane.xlu0 %340
    %v342 = vsel %vm161, %v338, 0.0
    %343 = vadd.xlane.f32.xlu0 %v342
    %v344 = vpop.xlane.xlu0 %343
    %v345 = vrcp.pop %v341
    %v346 = vrcp.pop %v344
    %v347 = vmul.f32 %v336, %v345
    %v348 = vmul.f32 %v338, %v346
    %349 = vrot.lane.b32.xlu0 %v127, 64
    %v350 = vpop.permute.xlu0 %349
    %v353 = vsel %vm161, %v347, 0
    %355 = vmatprep.subr.mxu0 0.0
    %356 = vmatpush1.msra.mxu0 %v350
    %357 = vmatprep.subr.mxu0 0.0
    %358 = vmatpush1.msra.mxu0 0.0
    %359 = vmatprep.subr.mxu0 0.0
    %360 = vmatpush1.msra.mxu0 0.0
    %361 = vmatprep.subr.mxu0 0.0
    %362 = vmatpush1.msra.mxu0 0.0
    %363 = vmatprep.subr.mxu0 0.0
    %364 = vmatpush1.msra.mxu0 0.0
    %365 = vmatprep.subr.mxu0 0.0
    %366 = vmatpush1.msra.mxu0 0.0
    %367 = vmatprep.subr.mxu0 0.0
    %368 = vmatpush1.msra.mxu0 0.0
    %369 = vmatprep.subr.mxu0 0.0
    %370 = vmatpush1.msra.mxu0 0.0
    %371 = vmatprep.subr.mxu0 0.0
    %372 = vmatpush1.msra.mxu0 0.0
    %373 = vmatprep.subr.mxu0 0.0
    %374 = vmatpush1.msra.mxu0 0.0
    %375 = vmatprep.subr.mxu0 0.0
    %376 = vmatpush1.msra.mxu0 0.0
    %377 = vmatprep.subr.mxu0 0.0
    %378 = vmatpush1.msra.mxu0 0.0
    %379 = vmatprep.subr.mxu0 0.0
    %380 = vmatpush1.msra.mxu0 0.0
    %381 = vmatprep.subr.mxu0 0.0
    %382 = vmatpush1.msra.mxu0 0.0
    %383 = vmatprep.subr.mxu0 0.0
    %384 = vmatpush1.msra.mxu0 0.0
    %385 = vmatprep.subr.mxu0 0.0
    %386 = vmatpush1.msra.mxu0 0.0
    %387 = vmatprep.subr.mxu0 0.0
    %388 = vmatpush1.msra.mxu0 0.0
    %389 = vmatprep.subr.mxu0 0.0
    %390 = vmatpush1.msra.mxu0 0.0
    %391 = vmatprep.subr.mxu0 0.0
    %392 = vmatpush1.msra.mxu0 0.0
    %393 = vmatprep.subr.mxu0 0.0
    %394 = vmatpush1.msra.mxu0 0.0
    %395 = vmatprep.subr.mxu0 0.0
    %396 = vmatpush1.msra.mxu0 0.0
    %397 = vmatprep.subr.mxu0 0.0
    %398 = vmatpush1.msra.mxu0 0.0
    %399 = vmatprep.subr.mxu0 0.0
    %400 = vmatpush1.msra.mxu0 0.0
    %401 = vmatprep.subr.mxu0 0.0
    %402 = vmatpush1.msra.mxu0 0.0
    %403 = vmatprep.subr.mxu0 0.0
    %404 = vmatpush1.msra.mxu0 0.0
    %405 = vmatprep.subr.mxu0 0.0
    %406 = vmatpush1.msra.mxu0 0.0
    %407 = vmatprep.subr.mxu0 0.0
    %408 = vmatpush1.msra.mxu0 0.0
    %409 = vmatprep.subr.mxu0 0.0
    %410 = vmatpush1.msra.mxu0 0.0
    %411 = vmatprep.subr.mxu0 0.0
    %412 = vmatpush1.msra.mxu0 0.0
    %413 = vmatprep.subr.mxu0 0.0
    %414 = vmatpush1.msra.mxu0 0.0
    %415 = vmatprep.subr.mxu0 0.0
    %416 = vmatpush1.msra.mxu0 0.0
    %417 = vmatprep.subr.mxu0 0.0
    %418 = vmatpush1.msra.mxu0 0.0
    %419 = vmatprep.mubr.f32.mxu0 0.0
    %420 = vmatmul.mubr.f32.gmra.mrb[0].mxu0 %v353
    %v421 = vpop.f32.mrb[0].mxu0
    %v422 = vadd.f32 0.0, %v421
    %v423 = vpop.f32.mrb[0].mxu0
    %424 = vdwg.mxu0
    %425 = vrot.lane.b32.xlu0 %v132, 64
    %v426 = vpop.permute.xlu0 %425
    %v429 = vsel %vm161, %v348, 0
    %431 = vmatprep.subr.mxu0 0.0
    %432 = vmatpush1.msra.mxu0 %v426
    %433 = vmatprep.subr.mxu0 0.0
    %434 = vmatpush1.msra.mxu0 0.0
    %435 = vmatprep.subr.mxu0 0.0
    %436 = vmatpush1.msra.mxu0 0.0
    %437 = vmatprep.subr.mxu0 0.0
    %438 = vmatpush1.msra.mxu0 0.0
    %439 = vmatprep.subr.mxu0 0.0
    %440 = vmatpush1.msra.mxu0 0.0
    %441 = vmatprep.subr.mxu0 0.0
    %442 = vmatpush1.msra.mxu0 0.0
    %443 = vmatprep.subr.mxu0 0.0
    %444 = vmatpush1.msra.mxu0 0.0
    %445 = vmatprep.subr.mxu0 0.0
    %446 = vmatpush1.msra.mxu0 0.0
    %447 = vmatprep.subr.mxu0 0.0
    %448 = vmatpush1.msra.mxu0 0.0
    %449 = vmatprep.subr.mxu0 0.0
    %450 = vmatpush1.msra.mxu0 0.0
    %451 = vmatprep.subr.mxu0 0.0
    %452 = vmatpush1.msra.mxu0 0.0
    %453 = vmatprep.subr.mxu0 0.0
    %454 = vmatpush1.msra.mxu0 0.0
    %455 = vmatprep.subr.mxu0 0.0
    %456 = vmatpush1.msra.mxu0 0.0
    %457 = vmatprep.subr.mxu0 0.0
    %458 = vmatpush1.msra.mxu0 0.0
    %459 = vmatprep.subr.mxu0 0.0
    %460 = vmatpush1.msra.mxu0 0.0
    %461 = vmatprep.subr.mxu0 0.0
    %462 = vmatpush1.msra.mxu0 0.0
    %463 = vmatprep.subr.mxu0 0.0
    %464 = vmatpush1.msra.mxu0 0.0
    %465 = vmatprep.subr.mxu0 0.0
    %466 = vmatpush1.msra.mxu0 0.0
    %467 = vmatprep.subr.mxu0 0.0
    %468 = vmatpush1.msra.mxu0 0.0
    %469 = vmatprep.subr.mxu0 0.0
    %470 = vmatpush1.msra.mxu0 0.0
    %471 = vmatprep.subr.mxu0 0.0
    %472 = vmatpush1.msra.mxu0 0.0
    %473 = vmatprep.subr.mxu0 0.0
    %474 = vmatpush1.msra.mxu0 0.0
    %475 = vmatprep.subr.mxu0 0.0
    %476 = vmatpush1.msra.mxu0 0.0
    %477 = vmatprep.subr.mxu0 0.0
    %478 = vmatpush1.msra.mxu0 0.0
    %479 = vmatprep.subr.mxu0 0.0
    %480 = vmatpush1.msra.mxu0 0.0
    %481 = vmatprep.subr.mxu0 0.0
    %482 = vmatpush1.msra.mxu0 0.0
    %483 = vmatprep.subr.mxu0 0.0
    %484 = vmatpush1.msra.mxu0 0.0
    %485 = vmatprep.subr.mxu0 0.0
    %486 = vmatpush1.msra.mxu0 0.0
    %487 = vmatprep.subr.mxu0 0.0
    %488 = vmatpush1.msra.mxu0 0.0
    %489 = vmatprep.subr.mxu0 0.0
    %490 = vmatpush1.msra.mxu0 0.0
    %491 = vmatprep.subr.mxu0 0.0
    %492 = vmatpush1.msra.mxu0 0.0
    %493 = vmatprep.subr.mxu0 0.0
    %494 = vmatpush1.msra.mxu0 0.0
    %495 = vmatprep.mubr.f32.mxu0 0.0
    %496 = vmatmul.mubr.f32.gmra.mrb[0].mxu0 %v429
    %v497 = vpop.f32.mrb[0].mxu0
    %v498 = vadd.f32 0.0, %v497
    %v499 = vpop.f32.mrb[0].mxu0
    %500 = vdwg.mxu0
    %501 = vrot.lane.b32.xlu0 %v127, 120
    %v502 = vpop.permute.xlu0 %501
    %503 = vrot.lane.b32.xlu0 %v127, 88
    %v504 = vpop.permute.xlu0 %503
    %v505 = vsel %vm161, %v502, 0
    %v507 = vsel %vm161, %v504, 0
    %509 = vmatprep.subr.mxu0 0.0
    %510 = vmatpush1.xpose.msra.mxu0 %v507
    %511 = vmatprep.subr.mxu0 0.0
    %512 = vmatpush1.xpose.msra.mxu0 0.0
    %513 = vmatprep.subr.mxu0 0.0
    %514 = vmatpush1.xpose.msra.mxu0 0.0
    %515 = vmatprep.subr.mxu0 0.0
    %516 = vmatpush1.xpose.msra.mxu0 0.0
    %517 = vmatprep.subr.mxu0 0.0
    %518 = vmatpush1.xpose.msra.mxu0 0.0
    %519 = vmatprep.subr.mxu0 0.0
    %520 = vmatpush1.xpose.msra.mxu0 0.0
    %521 = vmatprep.subr.mxu0 0.0
    %522 = vmatpush1.xpose.msra.mxu0 0.0
    %523 = vmatprep.subr.mxu0 0.0
    %524 = vmatpush1.xpose.msra.mxu0 0.0
    %525 = vmatprep.subr.mxu0 0.0
    %526 = vmatpush1.xpose.msra.mxu0 0.0
    %527 = vmatprep.subr.mxu0 0.0
    %528 = vmatpush1.xpose.msra.mxu0 0.0
    %529 = vmatprep.subr.mxu0 0.0
    %530 = vmatpush1.xpose.msra.mxu0 0.0
    %531 = vmatprep.subr.mxu0 0.0
    %532 = vmatpush1.xpose.msra.mxu0 0.0
    %533 = vmatprep.subr.mxu0 0.0
    %534 = vmatpush1.xpose.msra.mxu0 0.0
    %535 = vmatprep.subr.mxu0 0.0
    %536 = vmatpush1.xpose.msra.mxu0 0.0
    %537 = vmatprep.subr.mxu0 0.0
    %538 = vmatpush1.xpose.msra.mxu0 0.0
    %539 = vmatprep.subr.mxu0 0.0
    %540 = vmatpush1.xpose.msra.mxu0 0.0
    %541 = vmatprep.subr.mxu0 0.0
    %542 = vmatpush1.xpose.msra.mxu0 0.0
    %543 = vmatprep.subr.mxu0 0.0
    %544 = vmatpush1.xpose.msra.mxu0 0.0
    %545 = vmatprep.subr.mxu0 0.0
    %546 = vmatpush1.xpose.msra.mxu0 0.0
    %547 = vmatprep.subr.mxu0 0.0
    %548 = vmatpush1.xpose.msra.mxu0 0.0
    %549 = vmatprep.subr.mxu0 0.0
    %550 = vmatpush1.xpose.msra.mxu0 0.0
    %551 = vmatprep.subr.mxu0 0.0
    %552 = vmatpush1.xpose.msra.mxu0 0.0
    %553 = vmatprep.subr.mxu0 0.0
    %554 = vmatpush1.xpose.msra.mxu0 0.0
    %555 = vmatprep.subr.mxu0 0.0
    %556 = vmatpush1.xpose.msra.mxu0 0.0
    %557 = vmatprep.subr.mxu0 0.0
    %558 = vmatpush1.xpose.msra.mxu0 0.0
    %559 = vmatprep.subr.mxu0 0.0
    %560 = vmatpush1.xpose.msra.mxu0 0.0
    %561 = vmatprep.subr.mxu0 0.0
    %562 = vmatpush1.xpose.msra.mxu0 0.0
    %563 = vmatprep.subr.mxu0 0.0
    %564 = vmatpush1.xpose.msra.mxu0 0.0
    %565 = vmatprep.subr.mxu0 0.0
    %566 = vmatpush1.xpose.msra.mxu0 0.0
    %567 = vmatprep.subr.mxu0 0.0
    %568 = vmatpush1.xpose.msra.mxu0 0.0
    %569 = vmatprep.subr.mxu0 0.0
    %570 = vmatpush1.xpose.msra.mxu0 0.0
    %571 = vmatprep.subr.mxu0 0.0
    %572 = vmatpush1.xpose.msra.mxu0 0.0
    %573 = vmatprep.mubr.f32.mxu0 0.0
    %574 = vmatmul.mubr.f32.gmra.mrb[0].mxu0 %v505
    %v575 = vpop.f32.mrb[0].mxu0
    %v576 = vadd.f32 0.0, %v575
    %v577 = vpop.f32.mrb[0].mxu0
    %578 = vdwg.mxu0
    %579 = vrot.lane.b32.xlu0 %v132, 120
    %v580 = vpop.permute.xlu0 %579
    %581 = vrot.lane.b32.xlu0 %v132, 88
    %v582 = vpop.permute.xlu0 %581
    %v583 = vsel %vm161, %v580, 0
    %v585 = vsel %vm161, %v582, 0
    %587 = vmatprep.subr.mxu0 0.0
    %588 = vmatpush1.xpose.msra.mxu0 %v585
    %589 = vmatprep.subr.mxu0 0.0
    %590 = vmatpush1.xpose.msra.mxu0 0.0
    %591 = vmatprep.subr.mxu0 0.0
    %592 = vmatpush1.xpose.msra.mxu0 0.0
    %593 = vmatprep.subr.mxu0 0.0
    %594 = vmatpush1.xpose.msra.mxu0 0.0
    %595 = vmatprep.subr.mxu0 0.0
    %596 = vmatpush1.xpose.msra.mxu0 0.0
    %597 = vmatprep.subr.mxu0 0.0
    %598 = vmatpush1.xpose.msra.mxu0 0.0
    %599 = vmatprep.subr.mxu0 0.0
    %600 = vmatpush1.xpose.msra.mxu0 0.0
    %601 = vmatprep.subr.mxu0 0.0
    %602 = vmatpush1.xpose.msra.mxu0 0.0
    %603 = vmatprep.subr.mxu0 0.0
    %604 = vmatpush1.xpose.msra.mxu0 0.0
    %605 = vmatprep.subr.mxu0 0.0
    %606 = vmatpush1.xpose.msra.mxu0 0.0
    %607 = vmatprep.subr.mxu0 0.0
    %608 = vmatpush1.xpose.msra.mxu0 0.0
    %609 = vmatprep.subr.mxu0 0.0
    %610 = vmatpush1.xpose.msra.mxu0 0.0
    %611 = vmatprep.subr.mxu0 0.0
    %612 = vmatpush1.xpose.msra.mxu0 0.0
    %613 = vmatprep.subr.mxu0 0.0
    %614 = vmatpush1.xpose.msra.mxu0 0.0
    %615 = vmatprep.subr.mxu0 0.0
    %616 = vmatpush1.xpose.msra.mxu0 0.0
    %617 = vmatprep.subr.mxu0 0.0
    %618 = vmatpush1.xpose.msra.mxu0 0.0
    %619 = vmatprep.subr.mxu0 0.0
    %620 = vmatpush1.xpose.msra.mxu0 0.0
    %621 = vmatprep.subr.mxu0 0.0
    %622 = vmatpush1.xpose.msra.mxu0 0.0
    %623 = vmatprep.subr.mxu0 0.0
    %624 = vmatpush1.xpose.msra.mxu0 0.0
    %625 = vmatprep.subr.mxu0 0.0
    %626 = vmatpush1.xpose.msra.mxu0 0.0
    %627 = vmatprep.subr.mxu0 0.0
    %628 = vmatpush1.xpose.msra.mxu0 0.0
    %629 = vmatprep.subr.mxu0 0.0
    %630 = vmatpush1.xpose.msra.mxu0 0.0
    %631 = vmatprep.subr.mxu0 0.0
    %632 = vmatpush1.xpose.msra.mxu0 0.0
    %633 = vmatprep.subr.mxu0 0.0
    %634 = vmatpush1.xpose.msra.mxu0 0.0
    %635 = vmatprep.subr.mxu0 0.0
    %636 = vmatpush1.xpose.msra.mxu0 0.0
    %637 = vmatprep.subr.mxu0 0.0
    %638 = vmatpush1.xpose.msra.mxu0 0.0
    %639 = vmatprep.subr.mxu0 0.0
    %640 = vmatpush1.xpose.msra.mxu0 0.0
    %641 = vmatprep.subr.mxu0 0.0
    %642 = vmatpush1.xpose.msra.mxu0 0.0
    %643 = vmatprep.subr.mxu0 0.0
    %644 = vmatpush1.xpose.msra.mxu0 0.0
    %645 = vmatprep.subr.mxu0 0.0
    %646 = vmatpush1.xpose.msra.mxu0 0.0
    %647 = vmatprep.subr.mxu0 0.0
    %648 = vmatpush1.xpose.msra.mxu0 0.0
    %649 = vmatprep.subr.mxu0 0.0
    %650 = vmatpush1.xpose.msra.mxu0 0.0
    %651 = vmatprep.mubr.f32.mxu0 0.0
    %652 = vmatmul.mubr.f32.gmra.mrb[0].mxu0 %v583
    %v653 = vpop.f32.mrb[0].mxu0
    %v654 = vadd.f32 0.0, %v653
    %v655 = vpop.f32.mrb[0].mxu0
    %656 = vdwg.mxu0
    %v657 = vmul.f32 %v576, 0.35355338
    %v658 = vmul.f32 %v654, 0.35355338
    %v659 = vadd.f32 %v657, %v318
    %v660 = vadd.f32 %v658, %v322
    %v661 = vsel %vm161, %v659, -inf
    %662 = vmax.xlane.f32.xlu0 %v661
    %v663 = vpop.xlane.xlu0 %662
    %v664 = vsel %vm161, %v660, -inf
    %665 = vmax.xlane.f32.xlu0 %v664
    %v666 = vpop.xlane.xlu0 %665
    %v667 = vsub.f32 %v659, %v663
    %v668 = vsub.f32 %v660, %v666
    %v669 = vmul.f32 %v667, 1.442695
    %v670 = vpow.pop %v669
    %v671 = vmul.f32 %v668, 1.442695
    %v672 = vpow.pop %v671
    %v673 = vsel %vm161, %v670, 0.0
    %674 = vadd.xlane.f32.xlu0 %v673
    %v675 = vpop.xlane.xlu0 %674
    %v676 = vsel %vm161, %v672, 0.0
    %677 = vadd.xlane.f32.xlu0 %v676
    %v678 = vpop.xlane.xlu0 %677
    %v679 = vrcp.pop %v675
    %v680 = vrcp.pop %v678
    %v681 = vmul.f32 %v670, %v679
    %v682 = vmul.f32 %v672, %v680
    %683 = vrot.lane.b32.xlu0 %v127, 56
    %v684 = vpop.permute.xlu0 %683
    %v687 = vsel %vm161, %v681, 0
    %689 = vmatprep.subr.mxu0 0.0
    %690 = vmatpush1.msra.mxu0 %v684
    %691 = vmatprep.subr.mxu0 0.0
    %692 = vmatpush1.msra.mxu0 0.0
    %693 = vmatprep.subr.mxu0 0.0
    %694 = vmatpush1.msra.mxu0 0.0
    %695 = vmatprep.subr.mxu0 0.0
    %696 = vmatpush1.msra.mxu0 0.0
    %697 = vmatprep.subr.mxu0 0.0
    %698 = vmatpush1.msra.mxu0 0.0
    %699 = vmatprep.subr.mxu0 0.0
    %700 = vmatpush1.msra.mxu0 0.0
    %701 = vmatprep.subr.mxu0 0.0
    %702 = vmatpush1.msra.mxu0 0.0
    %703 = vmatprep.subr.mxu0 0.0
    %704 = vmatpush1.msra.mxu0 0.0
    %705 = vmatprep.subr.mxu0 0.0
    %706 = vmatpush1.msra.mxu0 0.0
    %707 = vmatprep.subr.mxu0 0.0
    %708 = vmatpush1.msra.mxu0 0.0
    %709 = vmatprep.subr.mxu0 0.0
    %710 = vmatpush1.msra.mxu0 0.0
    %711 = vmatprep.subr.mxu0 0.0
    %712 = vmatpush1.msra.mxu0 0.0
    %713 = vmatprep.subr.mxu0 0.0
    %714 = vmatpush1.msra.mxu0 0.0
    %715 = vmatprep.subr.mxu0 0.0
    %716 = vmatpush1.msra.mxu0 0.0
    %717 = vmatprep.subr.mxu0 0.0
    %718 = vmatpush1.msra.mxu0 0.0
    %719 = vmatprep.subr.mxu0 0.0
    %720 = vmatpush1.msra.mxu0 0.0
    %721 = vmatprep.subr.mxu0 0.0
    %722 = vmatpush1.msra.mxu0 0.0
    %723 = vmatprep.subr.mxu0 0.0
    %724 = vmatpush1.msra.mxu0 0.0
    %725 = vmatprep.subr.mxu0 0.0
    %726 = vmatpush1.msra.mxu0 0.0
    %727 = vmatprep.subr.mxu0 0.0
    %728 = vmatpush1.msra.mxu0 0.0
    %729 = vmatprep.subr.mxu0 0.0
    %730 = vmatpush1.msra.mxu0 0.0
    %731 = vmatprep.subr.mxu0 0.0
    %732 = vmatpush1.msra.mxu0 0.0
    %733 = vmatprep.subr.mxu0 0.0
    %734 = vmatpush1.msra.mxu0 0.0
    %735 = vmatprep.subr.mxu0 0.0
    %736 = vmatpush1.msra.mxu0 0.0
    %737 = vmatprep.subr.mxu0 0.0
    %738 = vmatpush1.msra.mxu0 0.0
    %739 = vmatprep.subr.mxu0 0.0
    %740 = vmatpush1.msra.mxu0 0.0
    %741 = vmatprep.subr.mxu0 0.0
    %742 = vmatpush1.msra.mxu0 0.0
    %743 = vmatprep.subr.mxu0 0.0
    %744 = vmatpush1.msra.mxu0 0.0
    %745 = vmatprep.subr.mxu0 0.0
    %746 = vmatpush1.msra.mxu0 0.0
    %747 = vmatprep.subr.mxu0 0.0
    %748 = vmatpush1.msra.mxu0 0.0
    %749 = vmatprep.subr.mxu0 0.0
    %750 = vmatpush1.msra.mxu0 0.0
    %751 = vmatprep.subr.mxu0 0.0
    %752 = vmatpush1.msra.mxu0 0.0
    %753 = vmatprep.mubr.f32.mxu0 0.0
    %754 = vmatmul.mubr.f32.gmra.mrb[0].mxu0 %v687
    %v755 = vpop.f32.mrb[0].mxu0
    %v756 = vadd.f32 0.0, %v755
    %v757 = vpop.f32.mrb[0].mxu0
    %758 = vdwg.mxu0
    %759 = vrot.lane.b32.xlu0 %v132, 56
    %v760 = vpop.permute.xlu0 %759
    %v763 = vsel %vm161, %v682, 0
    %765 = vmatprep.subr.mxu0 0.0
    %766 = vmatpush1.msra.mxu0 %v760
    %767 = vmatprep.subr.mxu0 0.0
    %768 = vmatpush1.msra.mxu0 0.0
    %769 = vmatprep.subr.mxu0 0.0
    %770 = vmatpush1.msra.mxu0 0.0
    %771 = vmatprep.subr.mxu0 0.0
    %772 = vmatpush1.msra.mxu0 0.0
    %773 = vmatprep.subr.mxu0 0.0
    %774 = vmatpush1.msra.mxu0 0.0
    %775 = vmatprep.subr.mxu0 0.0
    %776 = vmatpush1.msra.mxu0 0.0
    %777 = vmatprep.subr.mxu0 0.0
    %778 = vmatpush1.msra.mxu0 0.0
    %779 = vmatprep.subr.mxu0 0.0
    %780 = vmatpush1.msra.mxu0 0.0
    %781 = vmatprep.subr.mxu0 0.0
    %782 = vmatpush1.msra.mxu0 0.0
    %783 = vmatprep.subr.mxu0 0.0
    %784 = vmatpush1.msra.mxu0 0.0
    %785 = vmatprep.subr.mxu0 0.0
    %786 = vmatpush1.msra.mxu0 0.0
    %787 = vmatprep.subr.mxu0 0.0
    %788 = vmatpush1.msra.mxu0 0.0
    %789 = vmatprep.subr.mxu0 0.0
    %790 = vmatpush1.msra.mxu0 0.0
    %791 = vmatprep.subr.mxu0 0.0
    %792 = vmatpush1.msra.mxu0 0.0
    %793 = vmatprep.subr.mxu0 0.0
    %794 = vmatpush1.msra.mxu0 0.0
    %795 = vmatprep.subr.mxu0 0.0
    %796 = vmatpush1.msra.mxu0 0.0
    %797 = vmatprep.subr.mxu0 0.0
    %798 = vmatpush1.msra.mxu0 0.0
    %799 = vmatprep.subr.mxu0 0.0
    %800 = vmatpush1.msra.mxu0 0.0
    %801 = vmatprep.subr.mxu0 0.0
    %802 = vmatpush1.msra.mxu0 0.0
    %803 = vmatprep.subr.mxu0 0.0
    %804 = vmatpush1.msra.mxu0 0.0
    %805 = vmatprep.subr.mxu0 0.0
    %806 = vmatpush1.msra.mxu0 0.0
    %807 = vmatprep.subr.mxu0 0.0
    %808 = vmatpush1.msra.mxu0 0.0
    %809 = vmatprep.subr.mxu0 0.0
    %810 = vmatpush1.msra.mxu0 0.0
    %811 = vmatprep.subr.mxu0 0.0
    %812 = vmatpush1.msra.mxu0 0.0
    %813 = vmatprep.subr.mxu0 0.0
    %814 = vmatpush1.msra.mxu0 0.0
    %815 = vmatprep.subr.mxu0 0.0
    %816 = vmatpush1.msra.mxu0 0.0
    %817 = vmatprep.subr.mxu0 0.0
    %818 = vmatpush1.msra.mxu0 0.0
    %819 = vmatprep.subr.mxu0 0.0
    %820 = vmatpush1.msra.mxu0 0.0
    %821 = vmatprep.subr.mxu0 0.0
    %822 = vmatpush1.msra.mxu0 0.0
    %823 = vmatprep.subr.mxu0 0.0
    %824 = vmatpush1.msra.mxu0 0.0
    %825 = vmatprep.subr.mxu0 0.0
    %826 = vmatpush1.msra.mxu0 0.0
    %827 = vmatprep.subr.mxu0 0.0
    %828 = vmatpush1.msra.mxu0 0.0
    %829 = vmatprep.mubr.f32.mxu0 0.0
    %830 = vmatmul.mubr.f32.gmra.mrb[0].mxu0 %v763
    %v831 = vpop.f32.mrb[0].mxu0
    %v832 = vadd.f32 0.0, %v831
    %v833 = vpop.f32.mrb[0].mxu0
    %834 = vdwg.mxu0
    %835 = vrot.lane.b32.xlu0 %v127, 112
    %v836 = vpop.permute.xlu0 %835
    %837 = vrot.lane.b32.xlu0 %v127, 80
    %v838 = vpop.permute.xlu0 %837
    %v839 = vsel %vm161, %v836, 0
    %v841 = vsel %vm161, %v838, 0
    %843 = vmatprep.subr.mxu0 0.0
    %844 = vmatpush1.xpose.msra.mxu0 %v841
    %845 = vmatprep.subr.mxu0 0.0
    %846 = vmatpush1.xpose.msra.mxu0 0.0
    %847 = vmatprep.subr.mxu0 0.0
    %848 = vmatpush1.xpose.msra.mxu0 0.0
    %849 = vmatprep.subr.mxu0 0.0
    %850 = vmatpush1.xpose.msra.mxu0 0.0
    %851 = vmatprep.subr.mxu0 0.0
    %852 = vmatpush1.xpose.msra.mxu0 0.0
    %853 = vmatprep.subr.mxu0 0.0
    %854 = vmatpush1.xpose.msra.mxu0 0.0
    %855 = vmatprep.subr.mxu0 0.0
    %856 = vmatpush1.xpose.msra.mxu0 0.0
    %857 = vmatprep.subr.mxu0 0.0
    %858 = vmatpush1.xpose.msra.mxu0 0.0
    %859 = vmatprep.subr.mxu0 0.0
    %860 = vmatpush1.xpose.msra.mxu0 0.0
    %861 = vmatprep.subr.mxu0 0.0
    %862 = vmatpush1.xpose.msra.mxu0 0.0
    %863 = vmatprep.subr.mxu0 0.0
    %864 = vmatpush1.xpose.msra.mxu0 0.0
    %865 = vmatprep.subr.mxu0 0.0
    %866 = vmatpush1.xpose.msra.mxu0 0.0
    %867 = vmatprep.subr.mxu0 0.0
    %868 = vmatpush1.xpose.msra.mxu0 0.0
    %869 = vmatprep.subr.mxu0 0.0
    %870 = vmatpush1.xpose.msra.mxu0 0.0
    %871 = vmatprep.subr.mxu0 0.0
    %872 = vmatpush1.xpose.msra.mxu0 0.0
    %873 = vmatprep.subr.mxu0 0.0
    %874 = vmatpush1.xpose.msra.mxu0 0.0
    %875 = vmatprep.subr.mxu0 0.0
    %876 = vmatpush1.xpose.msra.mxu0 0.0
    %877 = vmatprep.subr.mxu0 0.0
    %878 = vmatpush1.xpose.msra.mxu0 0.0
    %879 = vmatprep.subr.mxu0 0.0
    %880 = vmatpush1.xpose.msra.mxu0 0.0
    %881 = vmatprep.subr.mxu0 0.0
    %882 = vmatpush1.xpose.msra.mxu0 0.0
    %883 = vmatprep.subr.mxu0 0.0
    %884 = vmatpush1.xpose.msra.mxu0 0.0
    %885 = vmatprep.subr.mxu0 0.0
    %886 = vmatpush1.xpose.msra.mxu0 0.0
    %887 = vmatprep.subr.mxu0 0.0
    %888 = vmatpush1.xpose.msra.mxu0 0.0
    %889 = vmatprep.subr.mxu0 0.0
    %890 = vmatpush1.xpose.msra.mxu0 0.0
    %891 = vmatprep.subr.mxu0 0.0
    %892 = vmatpush1.xpose.msra.mxu0 0.0
    %893 = vmatprep.subr.mxu0 0.0
    %894 = vmatpush1.xpose.msra.mxu0 0.0
    %895 = vmatprep.subr.mxu0 0.0
    %896 = vmatpush1.xpose.msra.mxu0 0.0
    %897 = vmatprep.subr.mxu0 0.0
    %898 = vmatpush1.xpose.msra.mxu0 0.0
    %899 = vmatprep.subr.mxu0 0.0
    %900 = vmatpush1.xpose.msra.mxu0 0.0
    %901 = vmatprep.subr.mxu0 0.0
    %902 = vmatpush1.xpose.msra.mxu0 0.0
    %903 = vmatprep.subr.mxu0 0.0
    %904 = vmatpush1.xpose.msra.mxu0 0.0
    %905 = vmatprep.subr.mxu0 0.0
    %906 = vmatpush1.xpose.msra.mxu0 0.0
    %907 = vmatprep.mubr.f32.mxu0 0.0
    %908 = vmatmul.mubr.f32.gmra.mrb[0].mxu0 %v839
    %v909 = vpop.f32.mrb[0].mxu0
    %v910 = vadd.f32 0.0, %v909
    %v911 = vpop.f32.mrb[0].mxu0
    %912 = vdwg.mxu0
    %913 = vrot.lane.b32.xlu0 %v132, 112
    %v914 = vpop.permute.xlu0 %913
    %915 = vrot.lane.b32.xlu0 %v132, 80
    %v916 = vpop.permute.xlu0 %915
    %v917 = vsel %vm161, %v914, 0
    %v919 = vsel %vm161, %v916, 0
    %921 = vmatprep.subr.mxu0 0.0
    %922 = vmatpush1.xpose.msra.mxu0 %v919
    %923 = vmatprep.subr.mxu0 0.0
    %924 = vmatpush1.xpose.msra.mxu0 0.0
    %925 = vmatprep.subr.mxu0 0.0
    %926 = vmatpush1.xpose.msra.mxu0 0.0
    %927 = vmatprep.subr.mxu0 0.0
    %928 = vmatpush1.xpose.msra.mxu0 0.0
    %929 = vmatprep.subr.mxu0 0.0
    %930 = vmatpush1.xpose.msra.mxu0 0.0
    %931 = vmatprep.subr.mxu0 0.0
    %932 = vmatpush1.xpose.msra.mxu0 0.0
    %933 = vmatprep.subr.mxu0 0.0
    %934 = vmatpush1.xpose.msra.mxu0 0.0
    %935 = vmatprep.subr.mxu0 0.0
    %936 = vmatpush1.xpose.msra.mxu0 0.0
    %937 = vmatprep.subr.mxu0 0.0
    %938 = vmatpush1.xpose.msra.mxu0 0.0
    %939 = vmatprep.subr.mxu0 0.0
    %940 = vmatpush1.xpose.msra.mxu0 0.0
    %941 = vmatprep.subr.mxu0 0.0
    %942 = vmatpush1.xpose.msra.mxu0 0.0
    %943 = vmatprep.subr.mxu0 0.0
    %944 = vmatpush1.xpose.msra.mxu0 0.0
    %945 = vmatprep.subr.mxu0 0.0
    %946 = vmatpush1.xpose.msra.mxu0 0.0
    %947 = vmatprep.subr.mxu0 0.0
    %948 = vmatpush1.xpose.msra.mxu0 0.0
    %949 = vmatprep.subr.mxu0 0.0
    %950 = vmatpush1.xpose.msra.mxu0 0.0
    %951 = vmatprep.subr.mxu0 0.0
    %952 = vmatpush1.xpose.msra.mxu0 0.0
    %953 = vmatprep.subr.mxu0 0.0
    %954 = vmatpush1.xpose.msra.mxu0 0.0
    %955 = vmatprep.subr.mxu0 0.0
    %956 = vmatpush1.xpose.msra.mxu0 0.0
    %957 = vmatprep.subr.mxu0 0.0
    %958 = vmatpush1.xpose.msra.mxu0 0.0
    %959 = vmatprep.subr.mxu0 0.0
    %960 = vmatpush1.xpose.msra.mxu0 0.0
    %961 = vmatprep.subr.mxu0 0.0
    %962 = vmatpush1.xpose.msra.mxu0 0.0
    %963 = vmatprep.subr.mxu0 0.0
    %964 = vmatpush1.xpose.msra.mxu0 0.0
    %965 = vmatprep.subr.mxu0 0.0
    %966 = vmatpush1.xpose.msra.mxu0 0.0
    %967 = vmatprep.subr.mxu0 0.0
    %968 = vmatpush1.xpose.msra.mxu0 0.0
    %969 = vmatprep.subr.mxu0 0.0
    %970 = vmatpush1.xpose.msra.mxu0 0.0
    %971 = vmatprep.subr.mxu0 0.0
    %972 = vmatpush1.xpose.msra.mxu0 0.0
    %973 = vmatprep.subr.mxu0 0.0
    %974 = vmatpush1.xpose.msra.mxu0 0.0
    %975 = vmatprep.subr.mxu0 0.0
    %976 = vmatpush1.xpose.msra.mxu0 0.0
    %977 = vmatprep.subr.mxu0 0.0
    %978 = vmatpush1.xpose.msra.mxu0 0.0
    %979 = vmatprep.subr.mxu0 0.0
    %980 = vmatpush1.xpose.msra.mxu0 0.0
    %981 = vmatprep.subr.mxu0 0.0
    %982 = vmatpush1.xpose.msra.mxu0 0.0
    %983 = vmatprep.subr.mxu0 0.0
    %984 = vmatpush1.xpose.msra.mxu0 0.0
    %985 = vmatprep.mubr.f32.mxu0 0.0
    %986 = vmatmul.mubr.f32.gmra.mrb[0].mxu0 %v917
    %v987 = vpop.f32.mrb[0].mxu0
    %v988 = vadd.f32 0.0, %v987
    %v989 = vpop.f32.mrb[0].mxu0
    %990 = vdwg.mxu0
    %v991 = vmul.f32 %v910, 0.35355338
    %v992 = vmul.f32 %v988, 0.35355338
    %v993 = vadd.f32 %v991, %v318
    %v994 = vadd.f32 %v992, %v322
    %v995 = vsel %vm161, %v993, -inf
    %996 = vmax.xlane.f32.xlu0 %v995
    %v997 = vpop.xlane.xlu0 %996
    %v998 = vsel %vm161, %v994, -inf
    %999 = vmax.xlane.f32.xlu0 %v998
    %v1000 = vpop.xlane.xlu0 %999
    %v1001 = vsub.f32 %v993, %v997
    %v1002 = vsub.f32 %v994, %v1000
    %v1003 = vmul.f32 %v1001, 1.442695
    %v1004 = vpow.pop %v1003
    %v1005 = vmul.f32 %v1002, 1.442695
    %v1006 = vpow.pop %v1005
    %v1007 = vsel %vm161, %v1004, 0.0
    %1008 = vadd.xlane.f32.xlu0 %v1007
    %v1009 = vpop.xlane.xlu0 %1008
    %v1010 = vsel %vm161, %v1006, 0.0
    %1011 = vadd.xlane.f32.xlu0 %v1010
    %v1012 = vpop.xlane.xlu0 %1011
    %v1013 = vrcp.pop %v1009
    %v1014 = vrcp.pop %v1012
    %v1015 = vmul.f32 %v1004, %v1013
    %v1016 = vmul.f32 %v1006, %v1014
    %1017 = vrot.lane.b32.xlu0 %v127, 48
    %v1018 = vpop.permute.xlu0 %1017
    %v1021 = vsel %vm161, %v1015, 0
    %1023 = vmatprep.subr.mxu0 0.0
    %1024 = vmatpush1.msra.mxu0 %v1018
    %1025 = vmatprep.subr.mxu0 0.0
    %1026 = vmatpush1.msra.mxu0 0.0
    %1027 = vmatprep.subr.mxu0 0.0
    %1028 = vmatpush1.msra.mxu0 0.0
    %1029 = vmatprep.subr.mxu0 0.0
    %1030 = vmatpush1.msra.mxu0 0.0
    %1031 = vmatprep.subr.mxu0 0.0
    %1032 = vmatpush1.msra.mxu0 0.0
    %1033 = vmatprep.subr.mxu0 0.0
    %1034 = vmatpush1.msra.mxu0 0.0
    %1035 = vmatprep.subr.mxu0 0.0
    %1036 = vmatpush1.msra.mxu0 0.0
    %1037 = vmatprep.subr.mxu0 0.0
    %1038 = vmatpush1.msra.mxu0 0.0
    %1039 = vmatprep.subr.mxu0 0.0
    %1040 = vmatpush1.msra.mxu0 0.0
    %1041 = vmatprep.subr.mxu0 0.0
    %1042 = vmatpush1.msra.mxu0 0.0
    %1043 = vmatprep.subr.mxu0 0.0
    %1044 = vmatpush1.msra.mxu0 0.0
    %1045 = vmatprep.subr.mxu0 0.0
    %1046 = vmatpush1.msra.mxu0 0.0
    %1047 = vmatprep.subr.mxu0 0.0
    %1048 = vmatpush1.msra.mxu0 0.0
    %1049 = vmatprep.subr.mxu0 0.0
    %1050 = vmatpush1.msra.mxu0 0.0
    %1051 = vmatprep.subr.mxu0 0.0
    %1052 = vmatpush1.msra.mxu0 0.0
    %1053 = vmatprep.subr.mxu0 0.0
    %1054 = vmatpush1.msra.mxu0 0.0
    %1055 = vmatprep.subr.mxu0 0.0
    %1056 = vmatpush1.msra.mxu0 0.0
    %1057 = vmatprep.subr.mxu0 0.0
    %1058 = vmatpush1.msra.mxu0 0.0
    %1059 = vmatprep.subr.mxu0 0.0
    %1060 = vmatpush1.msra.mxu0 0.0
    %1061 = vmatprep.subr.mxu0 0.0
    %1062 = vmatpush1.msra.mxu0 0.0
    %1063 = vmatprep.subr.mxu0 0.0
    %1064 = vmatpush1.msra.mxu0 0.0
    %1065 = vmatprep.subr.mxu0 0.0
    %1066 = vmatpush1.msra.mxu0 0.0
    %1067 = vmatprep.subr.mxu0 0.0
    %1068 = vmatpush1.msra.mxu0 0.0
    %1069 = vmatprep.subr.mxu0 0.0
    %1070 = vmatpush1.msra.mxu0 0.0
    %1071 = vmatprep.subr.mxu0 0.0
    %1072 = vmatpush1.msra.mxu0 0.0
    %1073 = vmatprep.subr.mxu0 0.0
    %1074 = vmatpush1.msra.mxu0 0.0
    %1075 = vmatprep.subr.mxu0 0.0
    %1076 = vmatpush1.msra.mxu0 0.0
    %1077 = vmatprep.subr.mxu0 0.0
    %1078 = vmatpush1.msra.mxu0 0.0
    %1079 = vmatprep.subr.mxu0 0.0
    %1080 = vmatpush1.msra.mxu0 0.0
    %1081 = vmatprep.subr.mxu0 0.0
    %1082 = vmatpush1.msra.mxu0 0.0
    %1083 = vmatprep.subr.mxu0 0.0
    %1084 = vmatpush1.msra.mxu0 0.0
    %1085 = vmatprep.subr.mxu0 0.0
    %1086 = vmatpush1.msra.mxu0 0.0
    %1087 = vmatprep.mubr.f32.mxu0 0.0
    %1088 = vmatmul.mubr.f32.gmra.mrb[0].mxu0 %v1021
    %v1089 = vpop.f32.mrb[0].mxu0
    %v1090 = vadd.f32 0.0, %v1089
    %v1091 = vpop.f32.mrb[0].mxu0
    %1092 = vdwg.mxu0
    %1093 = vrot.lane.b32.xlu0 %v132, 48
    %v1094 = vpop.permute.xlu0 %1093
    %v1097 = vsel %vm161, %v1016, 0
    %1099 = vmatprep.subr.mxu0 0.0
    %1100 = vmatpush1.msra.mxu0 %v1094
    %1101 = vmatprep.subr.mxu0 0.0
    %1102 = vmatpush1.msra.mxu0 0.0
    %1103 = vmatprep.subr.mxu0 0.0
    %1104 = vmatpush1.msra.mxu0 0.0
    %1105 = vmatprep.subr.mxu0 0.0
    %1106 = vmatpush1.msra.mxu0 0.0
    %1107 = vmatprep.subr.mxu0 0.0
    %1108 = vmatpush1.msra.mxu0 0.0
    %1109 = vmatprep.subr.mxu0 0.0
    %1110 = vmatpush1.msra.mxu0 0.0
    %1111 = vmatprep.subr.mxu0 0.0
    %1112 = vmatpush1.msra.mxu0 0.0
    %1113 = vmatprep.subr.mxu0 0.0
    %1114 = vmatpush1.msra.mxu0 0.0
    %1115 = vmatprep.subr.mxu0 0.0
    %1116 = vmatpush1.msra.mxu0 0.0
    %1117 = vmatprep.subr.mxu0 0.0
    %1118 = vmatpush1.msra.mxu0 0.0
    %1119 = vmatprep.subr.mxu0 0.0
    %1120 = vmatpush1.msra.mxu0 0.0
    %1121 = vmatprep.subr.mxu0 0.0
    %1122 = vmatpush1.msra.mxu0 0.0
    %1123 = vmatprep.subr.mxu0 0.0
    %1124 = vmatpush1.msra.mxu0 0.0
    %1125 = vmatprep.subr.mxu0 0.0
    %1126 = vmatpush1.msra.mxu0 0.0
    %1127 = vmatprep.subr.mxu0 0.0
    %1128 = vmatpush1.msra.mxu0 0.0
    %1129 = vmatprep.subr.mxu0 0.0
    %1130 = vmatpush1.msra.mxu0 0.0
    %1131 = vmatprep.subr.mxu0 0.0
    %1132 = vmatpush1.msra.mxu0 0.0
    %1133 = vmatprep.subr.mxu0 0.0
    %1134 = vmatpush1.msra.mxu0 0.0
    %1135 = vmatprep.subr.mxu0 0.0
    %1136 = vmatpush1.msra.mxu0 0.0
    %1137 = vmatprep.subr.mxu0 0.0
    %1138 = vmatpush1.msra.mxu0 0.0
    %1139 = vmatprep.subr.mxu0 0.0
    %1140 = vmatpush1.msra.mxu0 0.0
    %1141 = vmatprep.subr.mxu0 0.0
    %1142 = vmatpush1.msra.mxu0 0.0
    %1143 = vmatprep.subr.mxu0 0.0
    %1144 = vmatpush1.msra.mxu0 0.0
    %1145 = vmatprep.subr.mxu0 0.0
    %1146 = vmatpush1.msra.mxu0 0.0
    %1147 = vmatprep.subr.mxu0 0.0
    %1148 = vmatpush1.msra.mxu0 0.0
    %1149 = vmatprep.subr.mxu0 0.0
    %1150 = vmatpush1.msra.mxu0 0.0
    %1151 = vmatprep.subr.mxu0 0.0
    %1152 = vmatpush1.msra.mxu0 0.0
    %1153 = vmatprep.subr.mxu0 0.0
    %1154 = vmatpush1.msra.mxu0 0.0
    %1155 = vmatprep.subr.mxu0 0.0
    %1156 = vmatpush1.msra.mxu0 0.0
    %1157 = vmatprep.subr.mxu0 0.0
    %1158 = vmatpush1.msra.mxu0 0.0
    %1159 = vmatprep.subr.mxu0 0.0
    %1160 = vmatpush1.msra.mxu0 0.0
    %1161 = vmatprep.subr.mxu0 0.0
    %1162 = vmatpush1.msra.mxu0 0.0
    %1163 = vmatprep.mubr.f32.mxu0 0.0
    %1164 = vmatmul.mubr.f32.gmra.mrb[0].mxu0 %v1097
    %v1165 = vpop.f32.mrb[0].mxu0
    %v1166 = vadd.f32 0.0, %v1165
    %v1167 = vpop.f32.mrb[0].mxu0
    %1168 = vdwg.mxu0
    %1169 = vrot.lane.b32.xlu0 %v127, 104
    %v1170 = vpop.permute.xlu0 %1169
    %1171 = vrot.lane.b32.xlu0 %v127, 72
    %v1172 = vpop.permute.xlu0 %1171
    %v1173 = vsel %vm161, %v1170, 0
    %v1175 = vsel %vm161, %v1172, 0
    %1177 = vmatprep.subr.mxu0 0.0
    %1178 = vmatpush1.xpose.msra.mxu0 %v1175
    %1179 = vmatprep.subr.mxu0 0.0
    %1180 = vmatpush1.xpose.msra.mxu0 0.0
    %1181 = vmatprep.subr.mxu0 0.0
    %1182 = vmatpush1.xpose.msra.mxu0 0.0
    %1183 = vmatprep.subr.mxu0 0.0
    %1184 = vmatpush1.xpose.msra.mxu0 0.0
    %1185 = vmatprep.subr.mxu0 0.0
    %1186 = vmatpush1.xpose.msra.mxu0 0.0
    %1187 = vmatprep.subr.mxu0 0.0
    %1188 = vmatpush1.xpose.msra.mxu0 0.0
    %1189 = vmatprep.subr.mxu0 0.0
    %1190 = vmatpush1.xpose.msra.mxu0 0.0
    %1191 = vmatprep.subr.mxu0 0.0
    %1192 = vmatpush1.xpose.msra.mxu0 0.0
    %1193 = vmatprep.subr.mxu0 0.0
    %1194 = vmatpush1.xpose.msra.mxu0 0.0
    %1195 = vmatprep.subr.mxu0 0.0
    %1196 = vmatpush1.xpose.msra.mxu0 0.0
    %1197 = vmatprep.subr.mxu0 0.0
    %1198 = vmatpush1.xpose.msra.mxu0 0.0
    %1199 = vmatprep.subr.mxu0 0.0
    %1200 = vmatpush1.xpose.msra.mxu0 0.0
    %1201 = vmatprep.subr.mxu0 0.0
    %1202 = vmatpush1.xpose.msra.mxu0 0.0
    %1203 = vmatprep.subr.mxu0 0.0
    %1204 = vmatpush1.xpose.msra.mxu0 0.0
    %1205 = vmatprep.subr.mxu0 0.0
    %1206 = vmatpush1.xpose.msra.mxu0 0.0
    %1207 = vmatprep.subr.mxu0 0.0
    %1208 = vmatpush1.xpose.msra.mxu0 0.0
    %1209 = vmatprep.subr.mxu0 0.0
    %1210 = vmatpush1.xpose.msra.mxu0 0.0
    %1211 = vmatprep.subr.mxu0 0.0
    %1212 = vmatpush1.xpose.msra.mxu0 0.0
    %1213 = vmatprep.subr.mxu0 0.0
    %1214 = vmatpush1.xpose.msra.mxu0 0.0
    %1215 = vmatprep.subr.mxu0 0.0
    %1216 = vmatpush1.xpose.msra.mxu0 0.0
    %1217 = vmatprep.subr.mxu0 0.0
    %1218 = vmatpush1.xpose.msra.mxu0 0.0
    %1219 = vmatprep.subr.mxu0 0.0
    %1220 = vmatpush1.xpose.msra.mxu0 0.0
    %1221 = vmatprep.subr.mxu0 0.0
    %1222 = vmatpush1.xpose.msra.mxu0 0.0
    %1223 = vmatprep.subr.mxu0 0.0
    %1224 = vmatpush1.xpose.msra.mxu0 0.0
    %1225 = vmatprep.subr.mxu0 0.0
    %1226 = vmatpush1.xpose.msra.mxu0 0.0
    %1227 = vmatprep.subr.mxu0 0.0
    %1228 = vmatpush1.xpose.msra.mxu0 0.0
    %1229 = vmatprep.subr.mxu0 0.0
    %1230 = vmatpush1.xpose.msra.mxu0 0.0
    %1231 = vmatprep.subr.mxu0 0.0
    %1232 = vmatpush1.xpose.msra.mxu0 0.0
    %1233 = vmatprep.subr.mxu0 0.0
    %1234 = vmatpush1.xpose.msra.mxu0 0.0
    %1235 = vmatprep.subr.mxu0 0.0
    %1236 = vmatpush1.xpose.msra.mxu0 0.0
    %1237 = vmatprep.subr.mxu0 0.0
    %1238 = vmatpush1.xpose.msra.mxu0 0.0
    %1239 = vmatprep.subr.mxu0 0.0
    %1240 = vmatpush1.xpose.msra.mxu0 0.0
    %1241 = vmatprep.mubr.f32.mxu0 0.0
    %1242 = vmatmul.mubr.f32.gmra.mrb[0].mxu0 %v1173
    %v1243 = vpop.f32.mrb[0].mxu0
    %v1244 = vadd.f32 0.0, %v1243
    %v1245 = vpop.f32.mrb[0].mxu0
    %1246 = vdwg.mxu0
    %1247 = vrot.lane.b32.xlu0 %v132, 104
    %v1248 = vpop.permute.xlu0 %1247
    %1249 = vrot.lane.b32.xlu0 %v132, 72
    %v1250 = vpop.permute.xlu0 %1249
    %v1251 = vsel %vm161, %v1248, 0
    %v1253 = vsel %vm161, %v1250, 0
    %1255 = vmatprep.subr.mxu0 0.0
    %1256 = vmatpush1.xpose.msra.mxu0 %v1253
    %1257 = vmatprep.subr.mxu0 0.0
    %1258 = vmatpush1.xpose.msra.mxu0 0.0
    %1259 = vmatprep.subr.mxu0 0.0
    %1260 = vmatpush1.xpose.msra.mxu0 0.0
    %1261 = vmatprep.subr.mxu0 0.0
    %1262 = vmatpush1.xpose.msra.mxu0 0.0
    %1263 = vmatprep.subr.mxu0 0.0
    %1264 = vmatpush1.xpose.msra.mxu0 0.0
    %1265 = vmatprep.subr.mxu0 0.0
    %1266 = vmatpush1.xpose.msra.mxu0 0.0
    %1267 = vmatprep.subr.mxu0 0.0
    %1268 = vmatpush1.xpose.msra.mxu0 0.0
    %1269 = vmatprep.subr.mxu0 0.0
    %1270 = vmatpush1.xpose.msra.mxu0 0.0
    %1271 = vmatprep.subr.mxu0 0.0
    %1272 = vmatpush1.xpose.msra.mxu0 0.0
    %1273 = vmatprep.subr.mxu0 0.0
    %1274 = vmatpush1.xpose.msra.mxu0 0.0
    %1275 = vmatprep.subr.mxu0 0.0
    %1276 = vmatpush1.xpose.msra.mxu0 0.0
    %1277 = vmatprep.subr.mxu0 0.0
    %1278 = vmatpush1.xpose.msra.mxu0 0.0
    %1279 = vmatprep.subr.mxu0 0.0
    %1280 = vmatpush1.xpose.msra.mxu0 0.0
    %1281 = vmatprep.subr.mxu0 0.0
    %1282 = vmatpush1.xpose.msra.mxu0 0.0
    %1283 = vmatprep.subr.mxu0 0.0
    %1284 = vmatpush1.xpose.msra.mxu0 0.0
    %1285 = vmatprep.subr.mxu0 0.0
    %1286 = vmatpush1.xpose.msra.mxu0 0.0
    %1287 = vmatprep.subr.mxu0 0.0
    %1288 = vmatpush1.xpose.msra.mxu0 0.0
    %1289 = vmatprep.subr.mxu0 0.0
    %1290 = vmatpush1.xpose.msra.mxu0 0.0
    %1291 = vmatprep.subr.mxu0 0.0
    %1292 = vmatpush1.xpose.msra.mxu0 0.0
    %1293 = vmatprep.subr.mxu0 0.0
    %1294 = vmatpush1.xpose.msra.mxu0 0.0
    %1295 = vmatprep.subr.mxu0 0.0
    %1296 = vmatpush1.xpose.msra.mxu0 0.0
    %1297 = vmatprep.subr.mxu0 0.0
    %1298 = vmatpush1.xpose.msra.mxu0 0.0
    %1299 = vmatprep.subr.mxu0 0.0
    %1300 = vmatpush1.xpose.msra.mxu0 0.0
    %1301 = vmatprep.subr.mxu0 0.0
    %1302 = vmatpush1.xpose.msra.mxu0 0.0
    %1303 = vmatprep.subr.mxu0 0.0
    %1304 = vmatpush1.xpose.msra.mxu0 0.0
    %1305 = vmatprep.subr.mxu0 0.0
    %1306 = vmatpush1.xpose.msra.mxu0 0.0
    %1307 = vmatprep.subr.mxu0 0.0
    %1308 = vmatpush1.xpose.msra.mxu0 0.0
    %1309 = vmatprep.subr.mxu0 0.0
    %1310 = vmatpush1.xpose.msra.mxu0 0.0
    %1311 = vmatprep.subr.mxu0 0.0
    %1312 = vmatpush1.xpose.msra.mxu0 0.0
    %1313 = vmatprep.subr.mxu0 0.0
    %1314 = vmatpush1.xpose.msra.mxu0 0.0
    %1315 = vmatprep.subr.mxu0 0.0
    %1316 = vmatpush1.xpose.msra.mxu0 0.0
    %1317 = vmatprep.subr.mxu0 0.0
    %1318 = vmatpush1.xpose.msra.mxu0 0.0
    %1319 = vmatprep.mubr.f32.mxu0 0.0
    %1320 = vmatmul.mubr.f32.gmra.mrb[0].mxu0 %v1251
    %v1321 = vpop.f32.mrb[0].mxu0
    %v1322 = vadd.f32 0.0, %v1321
    %v1323 = vpop.f32.mrb[0].mxu0
    %1324 = vdwg.mxu0
    %v1325 = vmul.f32 %v1244, 0.35355338
    %v1326 = vmul.f32 %v1322, 0.35355338
    %v1327 = vadd.f32 %v1325, %v318
    %v1328 = vadd.f32 %v1326, %v322
    %v1329 = vsel %vm161, %v1327, -inf
    %1330 = vmax.xlane.f32.xlu0 %v1329
    %v1331 = vpop.xlane.xlu0 %1330
    %v1332 = vsel %vm161, %v1328, -inf
    %1333 = vmax.xlane.f32.xlu0 %v1332
    %v1334 = vpop.xlane.xlu0 %1333
    %v1335 = vsub.f32 %v1327, %v1331
    %v1336 = vsub.f32 %v1328, %v1334
    %v1337 = vmul.f32 %v1335, 1.442695
    %v1338 = vpow.pop %v1337
    %v1339 = vmul.f32 %v1336, 1.442695
    %v1340 = vpow.pop %v1339
    %v1341 = vsel %vm161, %v1338, 0.0
    %1342 = vadd.xlane.f32.xlu0 %v1341
    %v1343 = vpop.xlane.xlu0 %1342
    %v1344 = vsel %vm161, %v1340, 0.0
    %1345 = vadd.xlane.f32.xlu0 %v1344
    %v1346 = vpop.xlane.xlu0 %1345
    %v1347 = vrcp.pop %v1343
    %v1348 = vrcp.pop %v1346
    %v1349 = vmul.f32 %v1338, %v1347
    %v1350 = vmul.f32 %v1340, %v1348
    %1351 = vrot.lane.b32.xlu0 %v127, 40
    %v1352 = vpop.permute.xlu0 %1351
    %v1355 = vsel %vm161, %v1349, 0
    %1357 = vmatprep.subr.mxu0 0.0
    %1358 = vmatpush1.msra.mxu0 %v1352
    %1359 = vmatprep.subr.mxu0 0.0
    %1360 = vmatpush1.msra.mxu0 0.0
    %1361 = vmatprep.subr.mxu0 0.0
    %1362 = vmatpush1.msra.mxu0 0.0
    %1363 = vmatprep.subr.mxu0 0.0
    %1364 = vmatpush1.msra.mxu0 0.0
    %1365 = vmatprep.subr.mxu0 0.0
    %1366 = vmatpush1.msra.mxu0 0.0
    %1367 = vmatprep.subr.mxu0 0.0
    %1368 = vmatpush1.msra.mxu0 0.0
    %1369 = vmatprep.subr.mxu0 0.0
    %1370 = vmatpush1.msra.mxu0 0.0
    %1371 = vmatprep.subr.mxu0 0.0
    %1372 = vmatpush1.msra.mxu0 0.0
    %1373 = vmatprep.subr.mxu0 0.0
    %1374 = vmatpush1.msra.mxu0 0.0
    %1375 = vmatprep.subr.mxu0 0.0
    %1376 = vmatpush1.msra.mxu0 0.0
    %1377 = vmatprep.subr.mxu0 0.0
    %1378 = vmatpush1.msra.mxu0 0.0
    %1379 = vmatprep.subr.mxu0 0.0
    %1380 = vmatpush1.msra.mxu0 0.0
    %1381 = vmatprep.subr.mxu0 0.0
    %1382 = vmatpush1.msra.mxu0 0.0
    %1383 = vmatprep.subr.mxu0 0.0
    %1384 = vmatpush1.msra.mxu0 0.0
    %1385 = vmatprep.subr.mxu0 0.0
    %1386 = vmatpush1.msra.mxu0 0.0
    %1387 = vmatprep.subr.mxu0 0.0
    %1388 = vmatpush1.msra.mxu0 0.0
    %1389 = vmatprep.subr.mxu0 0.0
    %1390 = vmatpush1.msra.mxu0 0.0
    %1391 = vmatprep.subr.mxu0 0.0
    %1392 = vmatpush1.msra.mxu0 0.0
    %1393 = vmatprep.subr.mxu0 0.0
    %1394 = vmatpush1.msra.mxu0 0.0
    %1395 = vmatprep.subr.mxu0 0.0
    %1396 = vmatpush1.msra.mxu0 0.0
    %1397 = vmatprep.subr.mxu0 0.0
    %1398 = vmatpush1.msra.mxu0 0.0
    %1399 = vmatprep.subr.mxu0 0.0
    %1400 = vmatpush1.msra.mxu0 0.0
    %1401 = vmatprep.subr.mxu0 0.0
    %1402 = vmatpush1.msra.mxu0 0.0
    %1403 = vmatprep.subr.mxu0 0.0
    %1404 = vmatpush1.msra.mxu0 0.0
    %1405 = vmatprep.subr.mxu0 0.0
    %1406 = vmatpush1.msra.mxu0 0.0
    %1407 = vmatprep.subr.mxu0 0.0
    %1408 = vmatpush1.msra.mxu0 0.0
    %1409 = vmatprep.subr.mxu0 0.0
    %1410 = vmatpush1.msra.mxu0 0.0
    %1411 = vmatprep.subr.mxu0 0.0
    %1412 = vmatpush1.msra.mxu0 0.0
    %1413 = vmatprep.subr.mxu0 0.0
    %1414 = vmatpush1.msra.mxu0 0.0
    %1415 = vmatprep.subr.mxu0 0.0
    %1416 = vmatpush1.msra.mxu0 0.0
    %1417 = vmatprep.subr.mxu0 0.0
    %1418 = vmatpush1.msra.mxu0 0.0
    %1419 = vmatprep.subr.mxu0 0.0
    %1420 = vmatpush1.msra.mxu0 0.0
    %1421 = vmatprep.mubr.f32.mxu0 0.0
    %1422 = vmatmul.mubr.f32.gmra.mrb[0].mxu0 %v1355
    %v1423 = vpop.f32.mrb[0].mxu0
    %v1424 = vadd.f32 0.0, %v1423
    %v1425 = vpop.f32.mrb[0].mxu0
    %1426 = vdwg.mxu0
    %1427 = vrot.lane.b32.xlu0 %v132, 40
    %v1428 = vpop.permute.xlu0 %1427
    %v1431 = vsel %vm161, %v1350, 0
    %1433 = vmatprep.subr.mxu0 0.0
    %1434 = vmatpush1.msra.mxu0 %v1428
    %1435 = vmatprep.subr.mxu0 0.0
    %1436 = vmatpush1.msra.mxu0 0.0
    %1437 = vmatprep.subr.mxu0 0.0
    %1438 = vmatpush1.msra.mxu0 0.0
    %1439 = vmatprep.subr.mxu0 0.0
    %1440 = vmatpush1.msra.mxu0 0.0
    %1441 = vmatprep.subr.mxu0 0.0
    %1442 = vmatpush1.msra.mxu0 0.0
    %1443 = vmatprep.subr.mxu0 0.0
    %1444 = vmatpush1.msra.mxu0 0.0
    %1445 = vmatprep.subr.mxu0 0.0
    %1446 = vmatpush1.msra.mxu0 0.0
    %1447 = vmatprep.subr.mxu0 0.0
    %1448 = vmatpush1.msra.mxu0 0.0
    %1449 = vmatprep.subr.mxu0 0.0
    %1450 = vmatpush1.msra.mxu0 0.0
    %1451 = vmatprep.subr.mxu0 0.0
    %1452 = vmatpush1.msra.mxu0 0.0
    %1453 = vmatprep.subr.mxu0 0.0
    %1454 = vmatpush1.msra.mxu0 0.0
    %1455 = vmatprep.subr.mxu0 0.0
    %1456 = vmatpush1.msra.mxu0 0.0
    %1457 = vmatprep.subr.mxu0 0.0
    %1458 = vmatpush1.msra.mxu0 0.0
    %1459 = vmatprep.subr.mxu0 0.0
    %1460 = vmatpush1.msra.mxu0 0.0
    %1461 = vmatprep.subr.mxu0 0.0
    %1462 = vmatpush1.msra.mxu0 0.0
    %1463 = vmatprep.subr.mxu0 0.0
    %1464 = vmatpush1.msra.mxu0 0.0
    %1465 = vmatprep.subr.mxu0 0.0
    %1466 = vmatpush1.msra.mxu0 0.0
    %1467 = vmatprep.subr.mxu0 0.0
    %1468 = vmatpush1.msra.mxu0 0.0
    %1469 = vmatprep.subr.mxu0 0.0
    %1470 = vmatpush1.msra.mxu0 0.0
    %1471 = vmatprep.subr.mxu0 0.0
    %1472 = vmatpush1.msra.mxu0 0.0
    %1473 = vmatprep.subr.mxu0 0.0
    %1474 = vmatpush1.msra.mxu0 0.0
    %1475 = vmatprep.subr.mxu0 0.0
    %1476 = vmatpush1.msra.mxu0 0.0
    %1477 = vmatprep.subr.mxu0 0.0
    %1478 = vmatpush1.msra.mxu0 0.0
    %1479 = vmatprep.subr.mxu0 0.0
    %1480 = vmatpush1.msra.mxu0 0.0
    %1481 = vmatprep.subr.mxu0 0.0
    %1482 = vmatpush1.msra.mxu0 0.0
    %1483 = vmatprep.subr.mxu0 0.0
    %1484 = vmatpush1.msra.mxu0 0.0
    %1485 = vmatprep.subr.mxu0 0.0
    %1486 = vmatpush1.msra.mxu0 0.0
    %1487 = vmatprep.subr.mxu0 0.0
    %1488 = vmatpush1.msra.mxu0 0.0
    %1489 = vmatprep.subr.mxu0 0.0
    %1490 = vmatpush1.msra.mxu0 0.0
    %1491 = vmatprep.subr.mxu0 0.0
    %1492 = vmatpush1.msra.mxu0 0.0
    %1493 = vmatprep.subr.mxu0 0.0
    %1494 = vmatpush1.msra.mxu0 0.0
    %1495 = vmatprep.subr.mxu0 0.0
    %1496 = vmatpush1.msra.mxu0 0.0
    %1497 = vmatprep.mubr.f32.mxu0 0.0
    %1498 = vmatmul.mubr.f32.gmra.mrb[0].mxu0 %v1431
    %v1499 = vpop.f32.mrb[0].mxu0
    %v1500 = vadd.f32 0.0, %v1499
    %v1501 = vpop.f32.mrb[0].mxu0
    %1502 = vdwg.mxu0
    %1505 = vrot.lane.b32.xlu0 %v756, 8
    %v1506 = vpop.permute.xlu0 %1505
    %1507 = vrot.lane.b32.xlu0 %v832, 8
    %v1508 = vpop.permute.xlu0 %1507
    %1513 = vrot.lane.b32.xlu0 %v1090, 16
    %v1514 = vpop.permute.xlu0 %1513
    %1515 = vrot.lane.b32.xlu0 %v1166, 16
    %v1516 = vpop.permute.xlu0 %1515
    %1521 = vrot.lane.b32.xlu0 %v1424, 24
    %v1522 = vpop.permute.xlu0 %1521
    %1523 = vrot.lane.b32.xlu0 %v1500, 24
    %v1524 = vpop.permute.xlu0 %1523
    %v1527 = vsel %vm161, %v422, %v1506
    %v1528 = vsel %vm161, %v498, %v1508
    %vm1529 = vcmask 130048
    %v1530 = vsel %vm1529, %v1527, %v1514
    %v1531 = vsel %vm1529, %v1528, %v1516
    %vm1532 = vcmask 195584
    %v1533 = vsel %vm1532, %v1530, %v1522
    %v1534 = vsel %vm1532, %v1531, %v1524
    %v1535 = vld [vmem:[%s3] sm:$0xff]
    %v1536 = vld [vmem:[%s3 + $0x8] sm:$0xff]
    %v1537 = vld [vmem:[%s3 + $0x10] sm:$0xff]
    %v1538 = vld [vmem:[%s3 + $0x18] sm:$0xff]
    %v1539 = vlaneseq
    %v1540 = vshrl.u32 %v1539, 7
    %v1541 = vsub.s32 1, %v1540
    %v1542 = vrot.slane %v44, %v1541
    %v1544 = vsel %vm53, %v1533, 0
    %v1547 = vsel %vm53, %v1534, 0
    %1549 = vmatprep.subr.mxu0 0.0
    %1550 = vmatpush1.msra.mxu0 %v1535
    %1551 = vmatprep.subr.mxu0 0.0
    %1552 = vmatpush1.msra.mxu0 %v1536
    %1553 = vmatprep.subr.mxu0 0.0
    %1554 = vmatpush1.msra.mxu0 %v1537
    %1555 = vmatprep.subr.mxu0 0.0
    %1556 = vmatpush1.msra.mxu0 %v1538
    %1557 = vmatprep.subr.mxu0 0.0
    %1558 = vmatpush1.msra.mxu0 0.0
    %1559 = vmatprep.subr.mxu0 0.0
    %1560 = vmatpush1.msra.mxu0 0.0
    %1561 = vmatprep.subr.mxu0 0.0
    %1562 = vmatpush1.msra.mxu0 0.0
    %1563 = vmatprep.subr.mxu0 0.0
    %1564 = vmatpush1.msra.mxu0 0.0
    %1565 = vmatprep.subr.mxu0 0.0
    %1566 = vmatpush1.msra.mxu0 0.0
    %1567 = vmatprep.subr.mxu0 0.0
    %1568 = vmatpush1.msra.mxu0 0.0
    %1569 = vmatprep.subr.mxu0 0.0
    %1570 = vmatpush1.msra.mxu0 0.0
    %1571 = vmatprep.subr.mxu0 0.0
    %1572 = vmatpush1.msra.mxu0 0.0
    %1573 = vmatprep.subr.mxu0 0.0
    %1574 = vmatpush1.msra.mxu0 0.0
    %1575 = vmatprep.subr.mxu0 0.0
    %1576 = vmatpush1.msra.mxu0 0.0
    %1577 = vmatprep.subr.mxu0 0.0
    %1578 = vmatpush1.msra.mxu0 0.0
    %1579 = vmatprep.subr.mxu0 0.0
    %1580 = vmatpush1.msra.mxu0 0.0
    %1581 = vmatprep.subr.mxu0 0.0
    %1582 = vmatpush1.msra.mxu0 0.0
    %1583 = vmatprep.subr.mxu0 0.0
    %1584 = vmatpush1.msra.mxu0 0.0
    %1585 = vmatprep.subr.mxu0 0.0
    %1586 = vmatpush1.msra.mxu0 0.0
    %1587 = vmatprep.subr.mxu0 0.0
    %1588 = vmatpush1.msra.mxu0 0.0
    %1589 = vmatprep.subr.mxu0 0.0
    %1590 = vmatpush1.msra.mxu0 0.0
    %1591 = vmatprep.subr.mxu0 0.0
    %1592 = vmatpush1.msra.mxu0 0.0
    %1593 = vmatprep.subr.mxu0 0.0
    %1594 = vmatpush1.msra.mxu0 0.0
    %1595 = vmatprep.subr.mxu0 0.0
    %1596 = vmatpush1.msra.mxu0 0.0
    %1597 = vmatprep.subr.mxu0 0.0
    %1598 = vmatpush1.msra.mxu0 0.0
    %1599 = vmatprep.subr.mxu0 0.0
    %1600 = vmatpush1.msra.mxu0 0.0
    %1601 = vmatprep.subr.mxu0 0.0
    %1602 = vmatpush1.msra.mxu0 0.0
    %1603 = vmatprep.subr.mxu0 0.0
    %1604 = vmatpush1.msra.mxu0 0.0
    %1605 = vmatprep.subr.mxu0 0.0
    %1606 = vmatpush1.msra.mxu0 0.0
    %1607 = vmatprep.subr.mxu0 0.0
    %1608 = vmatpush1.msra.mxu0 0.0
    %1609 = vmatprep.subr.mxu0 0.0
    %1610 = vmatpush1.msra.mxu0 0.0
    %1611 = vmatprep.subr.mxu0 0.0
    %1612 = vmatpush1.msra.mxu0 0.0
    %1613 = vmatprep.mubr.f32.mxu0 0.0
    %1614 = vmatmul.mubr.f32.gmra.mrb[0].mxu0 %v1544
    %v1615 = vpop.f32.mrb[0].mxu0
    %v1616 = vadd.f32 %v1542, %v1615
    %v1617 = vpop.f32.mrb[0].mxu0
    %1618 = vmatprep.mubr.f32.mxu0 0.0
    %1619 = vmatmul.mubr.f32.gmra.mrb[0].mxu0 %v1547
    %v1620 = vpop.f32.mrb[0].mxu0
    %v1621 = vadd.f32 %v1542, %v1620
    %v1622 = vpop.f32.mrb[0].mxu0
    %1623 = vdwg.mxu0
    %v1624 = vadd.f32 %v1616, %v41
    %v1625 = vadd.f32 %v1621, %v42
    %v1626 = vsel %vm53, %v1624, 0.0
    %1627 = vadd.xlane.f32.xlu0 %v1626
    %v1628 = vpop.xlane.xlu0 %1627
    %v1629 = vsel %vm53, %v1625, 0.0
    %1630 = vadd.xlane.f32.xlu0 %v1629
    %v1631 = vpop.xlane.xlu0 %1630
    %v1632 = vrcp.pop 32.0
    %v1633 = vmul.f32 %v1628, %v1632
    %v1634 = vmul.f32 %v1631, %v1632
    %v1635 = vsub.f32 %v1624, %v1633
    %v1636 = vsub.f32 %v1625, %v1634
    %v1637 = vmul.f32 %v1635, %v1635
    %v1638 = vmul.f32 %v1636, %v1636
    %v1639 = vsel %vm53, %v1637, 0.0
    %1640 = vadd.xlane.f32.xlu0 %v1639
    %v1641 = vpop.xlane.xlu0 %1640
    %v1642 = vsel %vm53, %v1638, 0.0
    %1643 = vadd.xlane.f32.xlu0 %v1642
    %v1644 = vpop.xlane.xlu0 %1643
    %v1645 = vmul.f32 %v1641, %v1632
    %v1646 = vmul.f32 %v1644, %v1632
    %v1647 = vadd.f32 %v1645, 1e-12
    %v1648 = vadd.f32 %v1646, 1e-12
    %v1649 = vrsqrt.pop %v1647
    %v1650 = vrsqrt.pop %v1648
    %v1651 = vmul.f32 %v1635, %v1649
    %v1652 = vmul.f32 %v1636, %v1650
    %v1653 = vlaneseq
    %v1654 = vshrl.u32 %v1653, 7
    %v1655 = vsub.s32 2, %v1654
    %v1656 = vrot.slane %v44, %v1655
    %v1657 = vmul.f32 %v1651, %v1656
    %v1658 = vmul.f32 %v1652, %v1656
    %v1659 = vlaneseq
    %v1660 = vshrl.u32 %v1659, 7
    %v1661 = vsub.s32 3, %v1660
    %v1662 = vrot.slane %v44, %v1661
    %v1663 = vadd.f32 %v1657, %v1662
    %v1664 = vadd.f32 %v1658, %v1662
    %v1665 = vld [vmem:[%s4] sm:$0xff]
    %v1666 = vld [vmem:[%s4 + $0x8] sm:$0xff]
    %v1667 = vld [vmem:[%s4 + $0x10] sm:$0xff]
    %v1668 = vld [vmem:[%s4 + $0x18] sm:$0xff]
    %v1669 = vlaneseq
    %v1670 = vshrl.u32 %v1669, 7
    %v1671 = vsub.s32 4, %v1670
    %v1672 = vrot.slane %v44, %v1671
    %v1674 = vsel %vm53, %v1663, 0
    %v1677 = vsel %vm53, %v1664, 0
    %1679 = vmatprep.subr.mxu0 0.0
    %1680 = vmatpush1.msra.mxu0 %v1665
    %1681 = vmatprep.subr.mxu0 0.0
    %1682 = vmatpush1.msra.mxu0 %v1666
    %1683 = vmatprep.subr.mxu0 0.0
    %1684 = vmatpush1.msra.mxu0 %v1667
    %1685 = vmatprep.subr.mxu0 0.0
    %1686 = vmatpush1.msra.mxu0 %v1668
    %1687 = vmatprep.subr.mxu0 0.0
    %1688 = vmatpush1.msra.mxu0 0.0
    %1689 = vmatprep.subr.mxu0 0.0
    %1690 = vmatpush1.msra.mxu0 0.0
    %1691 = vmatprep.subr.mxu0 0.0
    %1692 = vmatpush1.msra.mxu0 0.0
    %1693 = vmatprep.subr.mxu0 0.0
    %1694 = vmatpush1.msra.mxu0 0.0
    %1695 = vmatprep.subr.mxu0 0.0
    %1696 = vmatpush1.msra.mxu0 0.0
    %1697 = vmatprep.subr.mxu0 0.0
    %1698 = vmatpush1.msra.mxu0 0.0
    %1699 = vmatprep.subr.mxu0 0.0
    %1700 = vmatpush1.msra.mxu0 0.0
    %1701 = vmatprep.subr.mxu0 0.0
    %1702 = vmatpush1.msra.mxu0 0.0
    %1703 = vmatprep.subr.mxu0 0.0
    %1704 = vmatpush1.msra.mxu0 0.0
    %1705 = vmatprep.subr.mxu0 0.0
    %1706 = vmatpush1.msra.mxu0 0.0
    %1707 = vmatprep.subr.mxu0 0.0
    %1708 = vmatpush1.msra.mxu0 0.0
    %1709 = vmatprep.subr.mxu0 0.0
    %1710 = vmatpush1.msra.mxu0 0.0
    %1711 = vmatprep.subr.mxu0 0.0
    %1712 = vmatpush1.msra.mxu0 0.0
    %1713 = vmatprep.subr.mxu0 0.0
    %1714 = vmatpush1.msra.mxu0 0.0
    %1715 = vmatprep.subr.mxu0 0.0
    %1716 = vmatpush1.msra.mxu0 0.0
    %1717 = vmatprep.subr.mxu0 0.0
    %1718 = vmatpush1.msra.mxu0 0.0
    %1719 = vmatprep.subr.mxu0 0.0
    %1720 = vmatpush1.msra.mxu0 0.0
    %1721 = vmatprep.subr.mxu0 0.0
    %1722 = vmatpush1.msra.mxu0 0.0
    %1723 = vmatprep.subr.mxu0 0.0
    %1724 = vmatpush1.msra.mxu0 0.0
    %1725 = vmatprep.subr.mxu0 0.0
    %1726 = vmatpush1.msra.mxu0 0.0
    %1727 = vmatprep.subr.mxu0 0.0
    %1728 = vmatpush1.msra.mxu0 0.0
    %1729 = vmatprep.subr.mxu0 0.0
    %1730 = vmatpush1.msra.mxu0 0.0
    %1731 = vmatprep.subr.mxu0 0.0
    %1732 = vmatpush1.msra.mxu0 0.0
    %1733 = vmatprep.subr.mxu0 0.0
    %1734 = vmatpush1.msra.mxu0 0.0
    %1735 = vmatprep.subr.mxu0 0.0
    %1736 = vmatpush1.msra.mxu0 0.0
    %1737 = vmatprep.subr.mxu0 0.0
    %1738 = vmatpush1.msra.mxu0 0.0
    %1739 = vmatprep.subr.mxu0 0.0
    %1740 = vmatpush1.msra.mxu0 0.0
    %1741 = vmatprep.subr.mxu0 0.0
    %1742 = vmatpush1.msra.mxu0 0.0
    %1743 = vmatprep.mubr.f32.mxu0 0.0
    %1744 = vmatmul.mubr.f32.gmra.mrb[0].mxu0 %v1674
    %v1745 = vpop.f32.mrb[0].mxu0
    %v1746 = vadd.f32 %v1672, %v1745
    %v1747 = vpop.f32.mrb[0].mxu0
    %1748 = vmatprep.mubr.f32.mxu0 0.0
    %1749 = vmatmul.mubr.f32.gmra.mrb[0].mxu0 %v1677
    %v1750 = vpop.f32.mrb[0].mxu0
    %v1751 = vadd.f32 %v1672, %v1750
    %v1752 = vpop.f32.mrb[0].mxu0
    %1753 = vdwg.mxu0
    %v1754 = vmul.f32 %v1746, 0.5
    %v1755 = vmul.f32 %v1751, 0.5
    %v1756 = vmul.f32 %v1746, 0.044715
    %v1757 = vmul.f32 %v1751, 0.044715
    %v1758 = vmul.f32 %v1756, %v1746
    %v1759 = vmul.f32 %v1757, %v1751
    %v1760 = vmul.f32 %v1758, %v1746
    %v1761 = vmul.f32 %v1759, %v1751
    %v1762 = vadd.f32 %v1746, %v1760
    %v1763 = vadd.f32 %v1751, %v1761
    %v1764 = vmul.f32 %v1762, 0.7978846
    %v1765 = vmul.f32 %v1763, 0.7978846
    %v1766 = vtanh.pop %v1764
    %v1767 = vtanh.pop %v1765
    %v1768 = vadd.f32 %v1766, 1.0
    %v1769 = vadd.f32 %v1767, 1.0
    %v1770 = vmul.f32 %v1754, %v1768
    %v1771 = vmul.f32 %v1755, %v1769
    %v1772 = vld [vmem:[%s5] sm:$0xff]
    %v1773 = vld [vmem:[%s5 + $0x8] sm:$0xff]
    %v1774 = vld [vmem:[%s5 + $0x10] sm:$0xff]
    %v1775 = vld [vmem:[%s5 + $0x18] sm:$0xff]
    %v1776 = vld [vmem:[%s5 + $0x20] sm:$0xff]
    %v1777 = vld [vmem:[%s5 + $0x28] sm:$0xff]
    %v1778 = vld [vmem:[%s5 + $0x30] sm:$0xff]
    %v1779 = vld [vmem:[%s5 + $0x38] sm:$0xff]
    %v1780 = vlaneseq
    %v1781 = vshrl.u32 %v1780, 7
    %v1782 = vsub.s32 5, %v1781
    %v1783 = vrot.slane %v44, %v1782
    %vm1784 = vcmask 523264
    %v1786 = vsel %vm1784, %v1770, 0
    %v1789 = vsel %vm1784, %v1771, 0
    %1791 = vmatprep.subr.mxu0 0.0
    %1792 = vmatpush1.msra.mxu0 %v1772
    %1793 = vmatprep.subr.mxu0 0.0
    %1794 = vmatpush1.msra.mxu0 %v1773
    %1795 = vmatprep.subr.mxu0 0.0
    %1796 = vmatpush1.msra.mxu0 %v1774
    %1797 = vmatprep.subr.mxu0 0.0
    %1798 = vmatpush1.msra.mxu0 %v1775
    %1799 = vmatprep.subr.mxu0 0.0
    %1800 = vmatpush1.msra.mxu0 %v1776
    %1801 = vmatprep.subr.mxu0 0.0
    %1802 = vmatpush1.msra.mxu0 %v1777
    %1803 = vmatprep.subr.mxu0 0.0
    %1804 = vmatpush1.msra.mxu0 %v1778
    %1805 = vmatprep.subr.mxu0 0.0
    %1806 = vmatpush1.msra.mxu0 %v1779
    %1807 = vmatprep.subr.mxu0 0.0
    %1808 = vmatpush1.msra.mxu0 0.0
    %1809 = vmatprep.subr.mxu0 0.0
    %1810 = vmatpush1.msra.mxu0 0.0
    %1811 = vmatprep.subr.mxu0 0.0
    %1812 = vmatpush1.msra.mxu0 0.0
    %1813 = vmatprep.subr.mxu0 0.0
    %1814 = vmatpush1.msra.mxu0 0.0
    %1815 = vmatprep.subr.mxu0 0.0
    %1816 = vmatpush1.msra.mxu0 0.0
    %1817 = vmatprep.subr.mxu0 0.0
    %1818 = vmatpush1.msra.mxu0 0.0
    %1819 = vmatprep.subr.mxu0 0.0
    %1820 = vmatpush1.msra.mxu0 0.0
    %1821 = vmatprep.subr.mxu0 0.0
    %1822 = vmatpush1.msra.mxu0 0.0
    %1823 = vmatprep.subr.mxu0 0.0
    %1824 = vmatpush1.msra.mxu0 0.0
    %1825 = vmatprep.subr.mxu0 0.0
    %1826 = vmatpush1.msra.mxu0 0.0
    %1827 = vmatprep.subr.mxu0 0.0
    %1828 = vmatpush1.msra.mxu0 0.0
    %1829 = vmatprep.subr.mxu0 0.0
    %1830 = vmatpush1.msra.mxu0 0.0
    %1831 = vmatprep.subr.mxu0 0.0
    %1832 = vmatpush1.msra.mxu0 0.0
    %1833 = vmatprep.subr.mxu0 0.0
    %1834 = vmatpush1.msra.mxu0 0.0
    %1835 = vmatprep.subr.mxu0 0.0
    %1836 = vmatpush1.msra.mxu0 0.0
    %1837 = vmatprep.subr.mxu0 0.0
    %1838 = vmatpush1.msra.mxu0 0.0
    %1839 = vmatprep.subr.mxu0 0.0
    %1840 = vmatpush1.msra.mxu0 0.0
    %1841 = vmatprep.subr.mxu0 0.0
    %1842 = vmatpush1.msra.mxu0 0.0
    %1843 = vmatprep.subr.mxu0 0.0
    %1844 = vmatpush1.msra.mxu0 0.0
    %1845 = vmatprep.subr.mxu0 0.0
    %1846 = vmatpush1.msra.mxu0 0.0
    %1847 = vmatprep.subr.mxu0 0.0
    %1848 = vmatpush1.msra.mxu0 0.0
    %1849 = vmatprep.subr.mxu0 0.0
    %1850 = vmatpush1.msra.mxu0 0.0
    %1851 = vmatprep.subr.mxu0 0.0
    %1852 = vmatpush1.msra.mxu0 0.0
    %1853 = vmatprep.subr.mxu0 0.0
    %1854 = vmatpush1.msra.mxu0 0.0
    %1855 = vmatprep.mubr.f32.mxu0 0.0
    %1856 = vmatmul.mubr.f32.gmra.mrb[0].mxu0 %v1786
    %v1857 = vpop.f32.mrb[0].mxu0
    %v1858 = vadd.f32 %v1783, %v1857
    %v1859 = vpop.f32.mrb[0].mxu0
    %1860 = vmatprep.mubr.f32.mxu0 0.0
    %1861 = vmatmul.mubr.f32.gmra.mrb[0].mxu0 %v1789
    %v1862 = vpop.f32.mrb[0].mxu0
    %v1863 = vadd.f32 %v1783, %v1862
    %v1864 = vpop.f32.mrb[0].mxu0
    %1865 = vdwg.mxu0
    %v1866 = vadd.f32 %v1858, %v1663
    %v1867 = vadd.f32 %v1863, %v1664
    %v1868 = vsel %vm53, %v1866, 0.0
    %1869 = vadd.xlane.f32.xlu0 %v1868
    %v1870 = vpop.xlane.xlu0 %1869
    %v1871 = vsel %vm53, %v1867, 0.0
    %1872 = vadd.xlane.f32.xlu0 %v1871
    %v1873 = vpop.xlane.xlu0 %1872
    %v1874 = vmul.f32 %v1870, %v1632
    %v1875 = vmul.f32 %v1873, %v1632
    %v1876 = vsub.f32 %v1866, %v1874
    %v1877 = vsub.f32 %v1867, %v1875
    %v1878 = vmul.f32 %v1876, %v1876
    %v1879 = vmul.f32 %v1877, %v1877
    %v1880 = vsel %vm53, %v1878, 0.0
    %1881 = vadd.xlane.f32.xlu0 %v1880
    %v1882 = vpop.xlane.xlu0 %1881
    %v1883 = vsel %vm53, %v1879, 0.0
    %1884 = vadd.xlane.f32.xlu0 %v1883
    %v1885 = vpop.xlane.xlu0 %1884
    %v1886 = vmul.f32 %v1882, %v1632
    %v1887 = vmul.f32 %v1885, %v1632
    %v1888 = vadd.f32 %v1886, 1e-12
    %v1889 = vadd.f32 %v1887, 1e-12
    %v1890 = vrsqrt.pop %v1888
    %v1891 = vrsqrt.pop %v1889
    %v1892 = vmul.f32 %v1876, %v1890
    %v1893 = vmul.f32 %v1877, %v1891
    %v1894 = vlaneseq
    %v1895 = vshrl.u32 %v1894, 7
    %v1896 = vsub.s32 6, %v1895
    %v1897 = vrot.slane %v44, %v1896
    %v1898 = vmul.f32 %v1892, %v1897
    %v1899 = vmul.f32 %v1893, %v1897
    %v1900 = vlaneseq
    %v1901 = vshrl.u32 %v1900, 7
    %v1902 = vsub.s32 7, %v1901
    %v1903 = vrot.slane %v44, %v1902
    %v1904 = vadd.f32 %v1898, %v1903
    %v1905 = vadd.f32 %v1899, %v1903
    %1906 = vst.msk [vmem:[#allocation5] sm:$0xff] %vm53, %v1904
    %1907 = vst.msk [vmem:[#allocation5 + $0x8] sm:$0xff] %vm53, %v1905
    // Predicated region
    $region34: #{tpu_custom_call.1} parent=1 // pred_check
      _
    $region35: #{tpu_custom_call.1} parent=1 // pred_check_branch
      %1909 = sbr.rel (0) target = $region37
    $region36: #{tpu_custom_call.1} parent=1 // pred_region
      %s1911 = ssub.s32 256, 256
      %1912 = vsyncadd [#allocation4], %s1911
      %s1913 = sshll.u32 [#allocation5], 4
      %s1914 = int_to_ptr.vmem [resolvable:$true] %s1913
      %1919 = dma.vmem_to_hbm [thread:$0]  %s1914, 256, %s7, [#allocation4], 128, 128, 8
    $region37: #{tpu_custom_call.1} parent=1 // pred_fallthru
      _
    // Predicated region
    $region38: #{tpu_custom_call.1} parent=1 // pred_check
      _
    $region39: #{tpu_custom_call.1} parent=1 // pred_check_branch
      %1921 = sbr.rel (0) target = $region41
    $region40: #{tpu_custom_call.1} parent=1 // pred_region
      %1922 = dma.done [#allocation4], 256
    $region41: #{tpu_custom_call.1} parent=1 // pred_fallthru
      _
    %1923 = vsyncpa [#allocation3], 1
    %1924 = vsyncpa [#allocation4], 1

</llo_original>
